<compile_context>
chip_gen: v7x
topology: tpu7x:2x2x1
jax: 0.10.0
libtpu: 0.0.40
codegen_flags: <defaults>
</compile_context>

<pallas_src>
import functools

import jax
import jax.numpy as jnp
from jax import lax
from jax.experimental import pallas as pl
from jax.experimental.pallas import tpu as pltpu


# ----------------------------------------------------------------------------
# Pallas kernel: the whole Discriminator forward for one batch element.
# Grid = (B,); each program processes the full (N, C) point set of one sample.
# ----------------------------------------------------------------------------
def _disc_kernel(ti, n_blocks,
                 x_ref,
                 w1, b1, w2, b2,          # mlp_conv1
                 wfgh, bfgh,              # fused attention convF|convG|convH
                 w3, b3, w4, b4,          # mlp_conv2
                 w5, b5, w6, b6,          # mlp
                 gamma_ref,               # SMEM scalar
                 out_ref,
                 o_acc, g_scr, h_scr):    # VMEM scratch
    f32 = jnp.float32
    bf16 = jnp.bfloat16

    def relu(a):
        return jnp.maximum(a, 0.0)

    x = x_ref[0]                                               # (N, Cin) f32

    # ---- mlp_conv1: Cin -> 32 (ReLU) -> 64 (no ReLU on last layer) ----
    # K = Cin is tiny; keep this single matmul in f32 (negligible cost).
    h1 = relu(jnp.dot(x, w1[...], preferred_element_type=f32) + b1[...])
    h2 = jnp.dot(h1.astype(bf16), w2[...], preferred_element_type=f32) + b2[...]
    h2_bf = h2.astype(bf16)                                    # (N, 64)

    # ---- global max over points (torch.max over dim=2) ----
    gmax = jnp.max(h2, axis=0, keepdims=True)                  # (1, 64)
    gmax_bf = gmax.astype(bf16)

    # ---- fused attention projections [f | g | h]; feat never materialized:
    #      relu(feat @ W + b) == relu(h2 @ W[:64] + (gmax @ W[64:] + b))
    row_fgh = (jnp.dot(gmax_bf, wfgh[64:128, :], preferred_element_type=f32)
               + bfgh[...])                                    # (1, 192)
    fgh = relu(jnp.dot(h2_bf, wfgh[0:64, :], preferred_element_type=f32)
               + row_fgh)                                      # (N, 192)

    # f transposed once outside the loop so the per-block matmul has no
    # loop-carried transpose; g/h stored as bf16 in VMEM for ref slicing.
    f_t_bf = jnp.transpose(fgh[:, 0:32]).astype(bf16)          # (32, N)
    g_scr[...] = fgh[:, 32:64].astype(bf16)                    # (N, 32)
    h_scr[...] = fgh[:, 64:192].astype(bf16)                   # (N, 128)

    # ---- attention: i-block tiled softmax(g f^T), (N,128) f32 accumulator --
    # s[i, j] = sum_c g[i, c] * f[j, c]; softmax over j (the full row, so each
    # i-block's softmax is exact and its contribution is final).
    o_acc[...] = jnp.zeros_like(o_acc)

    @pl.loop(0, n_blocks)
    def _att_block(s):
        i0 = pl.multiple_of(s * ti, ti)
        g_blk = g_scr[pl.ds(i0, ti), :]                        # (ti, 32)
        h_blk = h_scr[pl.ds(i0, ti), :]                        # (ti, 128)
        sc = jnp.dot(g_blk, f_t_bf, preferred_element_type=f32)  # (ti, N)
        sc = sc - jnp.max(sc, axis=1, keepdims=True)
        e = jnp.exp(sc)
        inv = pl.reciprocal(jnp.sum(e, axis=1, keepdims=True), approx=True)
        beta = (e * inv).astype(bf16)                          # (ti, N)
        # o[j, c] += sum_i beta[i, j] * h[i, c]   (beta_blk^T @ h_blk)
        o_acc[...] += lax.dot_general(beta, h_blk, (((0,), (0,)), ((), ())),
                                      preferred_element_type=f32)

    gamma = gamma_ref[0]
    go_bf = (gamma * o_acc[...]).astype(bf16)                  # (N, 128)

    # ---- mlp_conv2 layer 0 with the residual decomposed:
    #      relu((gamma*o + feat) @ w3 + b3)
    #   == relu(gamma*o @ w3 + h2 @ w3[:64] + (gmax @ w3[64:] + b3))
    row3 = jnp.dot(gmax_bf, w3[64:128, :], preferred_element_type=f32) + b3[...]
    h3 = relu(jnp.dot(go_bf, w3[...], preferred_element_type=f32)
              + jnp.dot(h2_bf, w3[0:64, :], preferred_element_type=f32)
              + row3)                                          # (N, 128)
    h4 = jnp.dot(h3.astype(bf16), w4[...], preferred_element_type=f32) + b4[...]

    # ---- global max + mlp: 256 -> 256 (ReLU) -> 1 ----
    m = jnp.max(h4, axis=0, keepdims=True)                     # (1, 256)
    h5 = relu(jnp.dot(m.astype(bf16), w5[...], preferred_element_type=f32)
              + b5[...])
    out = jnp.dot(h5.astype(bf16), w6[...], preferred_element_type=f32) + b6[...]
    out_ref[...] = out.reshape(1, 1, 1)


# ----------------------------------------------------------------------------
# Wrapper
# ----------------------------------------------------------------------------
def discriminator_forward(x_nlc, params, *, block_i=256):
    """x_nlc: (B, N, Cin) float32 (channels-last); returns (B, 1) float32."""
    (w1, b1, w2, b2, wf, bf_, wg, bg, wh, bh, gamma,
     w3, b3, w4, b4, w5, b5, w6, b6) = params
    B, N, Cin = x_nlc.shape
    f32, bf16 = jnp.float32, jnp.bfloat16

    # i-block size for the tiled attention: <=256 keeps the (ti, N) score
    # block + accumulators inside v7x's 64 MiB VMEM at realistic N; 512-1024
    # is fine on v5e/v6e (128 MiB).
    if N <= block_i:
        ti = N
    else:
        assert N % block_i == 0, "N must be a multiple of block_i"
        ti = block_i
    n_blocks = N // ti

    # Fuse convF|convG|convH weights into one (128, 192) matmul: [f | g | h].
    wfgh = jnp.concatenate([wf, wg, wh], axis=1).astype(bf16)
    bfgh = jnp.concatenate([bf_, bg, bh], axis=1).astype(f32)

    kernel_params = (
        w1.astype(f32), b1.astype(f32),       # tiny K=Cin layer stays f32
        w2.astype(bf16), b2.astype(f32),
        wfgh, bfgh,
        w3.astype(bf16), b3.astype(f32),
        w4.astype(bf16), b4.astype(f32),
        w5.astype(bf16), b5.astype(f32),
        w6.astype(bf16), b6.astype(f32),
    )
    gamma_smem = jnp.reshape(gamma, (1,)).astype(f32)

    in_specs = [pl.BlockSpec((1, N, Cin), lambda b: (b, 0, 0))]
    for p in kernel_params:
        in_specs.append(pl.BlockSpec(p.shape, lambda b: (0, 0)))
    in_specs.append(pl.BlockSpec(memory_space=pltpu.MemorySpace.SMEM))  # gamma

    # Advisory cost estimate (per-point matmuls + N^2 attention + exp).
    flops = 2 * B * (N * Cin * 32 + N * 32 * 64
                     + 64 * 192 + N * 64 * 192
                     + N * N * 32 + N * N * 128
                     + 64 * 128 + N * 64 * 128 + N * 128 * 128
                     + N * 128 * 256 + 256 * 256 + 256)
    transcendentals = B * (N * N + N)
    param_bytes = sum(int(p.size) * p.dtype.itemsize for p in kernel_params)
    bytes_accessed = int(x_nlc.size) * 4 + param_bytes + 4 + B * 4
    cost = pl.CostEstimate(flops=int(flops),
                           transcendentals=int(transcendentals),
                           bytes_accessed=int(bytes_accessed))

    # VMEM budget: activations + score block + double-buffered params.
    act_bytes = ((N * 64 + N * 192 + N * 128 + N * 128 + N * 256) * 4
                 + (N * 32 + N * 128 + 32 * N) * 2
                 + 2 * ti * N * 4
                 + 2 * N * 128 * 4)
    vmem_limit = int(min(max(2 * (act_bytes + 2 * param_bytes),
                             32 * 1024 * 1024),
                         64 * 1024 * 1024))

    out = pl.pallas_call(
        functools.partial(_disc_kernel, ti, n_blocks),
        out_shape=jax.ShapeDtypeStruct((B, 1, 1), f32),
        grid=(B,),
        in_specs=in_specs,
        out_specs=pl.BlockSpec((1, 1, 1), lambda b: (b, 0, 0)),
        scratch_shapes=[
            pltpu.VMEM((N, 128), f32),    # o accumulator
            pltpu.VMEM((N, 32), bf16),    # g (bf16)
            pltpu.VMEM((N, 128), bf16),   # h (bf16)
        ],
        compiler_params=pltpu.CompilerParams(
            dimension_semantics=("parallel",),  # even B keeps both v7x TCs busy
            vmem_limit_bytes=vmem_limit),
        cost_estimate=cost,
    )(x_nlc, *kernel_params, gamma_smem)
    return out.reshape(B, 1)


# ----------------------------------------------------------------------------
# Deterministic parameter construction (shapes from Discriminator.__init__)
# ----------------------------------------------------------------------------
def init_params(key, in_channels, start_number=32):
    s = start_number

    def dense(k, cin, cout, scale=0.1):
        kw, kb = jax.random.split(k)
        w = jax.random.normal(kw, (cin, cout), jnp.float32) * scale
        b = jax.random.normal(kb, (1, cout), jnp.float32) * scale
        return w, b

    keys = jax.random.split(key, 10)
    w1, b1 = dense(keys[0], in_channels, s)        # mlp_conv1 layer 0
    w2, b2 = dense(keys[1], s, 2 * s)              # mlp_conv1 layer 1
    wf, bf_ = dense(keys[2], 4 * s, s)             # attention convF (128->32)
    wg, bg = dense(keys[3], 4 * s, s)              # attention convG (128->32)
    wh, bh = dense(keys[4], 4 * s, 4 * s)          # attention convH (128->128)
    # PyTorch initializes gamma to 0; use a nonzero value so the attention
    # branch is numerically exercised in this test.
    gamma = jnp.full((1,), 0.5, jnp.float32)
    w3, b3 = dense(keys[5], 4 * s, 4 * s)          # mlp_conv2 layer 0
    w4, b4 = dense(keys[6], 4 * s, 8 * s)          # mlp_conv2 layer 1
    w5, b5 = dense(keys[7], 8 * s, 8 * s)          # mlp layer 0
    w6, b6 = dense(keys[8], 8 * s, 1)              # mlp layer 1
    return (w1, b1, w2, b2, wf, bf_, wg, bg, wh, bh, gamma,
            w3, b3, w4, b4, w5, b5, w6, b6)


# ----------------------------------------------------------------------------
# Pure-JAX reference (mirrors the PyTorch forward; bf16 matmul inputs,
# f32 accumulation, exact softmax) for a correctness check.
# ----------------------------------------------------------------------------
def reference_forward(x_nlc, params):
    (w1, b1, w2, b2, wf, bf_, wg, bg, wh, bh, gamma,
     w3, b3, w4, b4, w5, b5, w6, b6) = params
    f32, bf16 = jnp.float32, jnp.bfloat16
    relu = jax.nn.relu

    def mm(a, w):
        return jnp.dot(a.astype(bf16), w.astype(bf16), preferred_element_type=f32)

    h1 = relu(jnp.dot(x_nlc, w1, preferred_element_type=f32) + b1)
    h2 = mm(h1, w2) + b2                                        # (B, N, 64)
    gmax = jnp.max(h2, axis=1, keepdims=True)                   # (B, 1, 64)
    feat = jnp.concatenate([h2, jnp.broadcast_to(gmax, h2.shape)], axis=2)
    f = relu(mm(feat, wf) + bf_)
    g = relu(mm(feat, wg) + bg)
    h = relu(mm(feat, wh) + bh)
    s = jnp.einsum('bic,bjc->bij', g.astype(bf16), f.astype(bf16),
                   preferred_element_type=f32)
    beta = jax.nn.softmax(s, axis=2)
    o = jnp.einsum('bij,bic->bjc', beta.astype(bf16), h.astype(bf16),
                   preferred_element_type=f32)
    xatt = gamma[0] * o + feat
    h3 = relu(mm(xatt, w3) + b3)
    h4 = mm(h3, w4) + b4
    m = jnp.max(h4, axis=1)                                     # (B, 256)
    h5 = relu(mm(m, w5) + b5)
    return mm(h5, w6) + b6                                      # (B, 1)


if __name__ == "__main__":
    B, Cin, N = 2, 4, 16          # PyTorch input would be (B, Cin, N) NCL
    key = jax.random.PRNGKey(0)
    kx, kp = jax.random.split(key)

    # Build input in PyTorch layout, then transpose to kernel layout (B, N, C)
    x_ncl = jax.random.normal(kx, (B, Cin, N), jnp.float32)
    x_nlc = jnp.transpose(x_ncl, (0, 2, 1))

    params = init_params(kp, in_channels=Cin)

    out = discriminator_forward(x_nlc, params, block_i=256)
    out = jax.block_until_ready(out)

    ref = reference_forward(x_nlc, params)
    assert out.shape == (B, 1), out.shape
    # bf16 MXU operands + approx reciprocal -> loosened tolerance vs reference.
    assert jnp.allclose(out, ref, atol=3e-2, rtol=3e-2), (out, ref)
    print("KERNEL_OK")
</pallas_src>

<mosaic_0001>
module attributes {stable_mosaic.version = 11 : i64} {
  func.func @_disc_kernel(%arg0: i32, %arg1: memref<1x16x4xf32, #tpu.memory_space<vmem>>, %arg2: memref<4x32xf32, #tpu.memory_space<vmem>>, %arg3: memref<1x32xf32, #tpu.memory_space<vmem>>, %arg4: memref<32x64xbf16, #tpu.memory_space<vmem>>, %arg5: memref<1x64xf32, #tpu.memory_space<vmem>>, %arg6: memref<128x192xbf16, #tpu.memory_space<vmem>>, %arg7: memref<1x192xf32, #tpu.memory_space<vmem>>, %arg8: memref<128x128xbf16, #tpu.memory_space<vmem>>, %arg9: memref<1x128xf32, #tpu.memory_space<vmem>>, %arg10: memref<128x256xbf16, #tpu.memory_space<vmem>>, %arg11: memref<1x256xf32, #tpu.memory_space<vmem>>, %arg12: memref<256x256xbf16, #tpu.memory_space<vmem>>, %arg13: memref<1x256xf32, #tpu.memory_space<vmem>>, %arg14: memref<256x1xbf16, #tpu.memory_space<vmem>>, %arg15: memref<1x1xf32, #tpu.memory_space<vmem>>, %arg16: memref<1xf32, #tpu.memory_space<smem>>, %arg17: memref<1x1x1xf32, #tpu.memory_space<vmem>>, %arg18: memref<16x128xf32, #tpu.memory_space<vmem>>, %arg19: memref<16x32xbf16, #tpu.memory_space<vmem>>, %arg20: memref<16x128xbf16, #tpu.memory_space<vmem>>) attributes {dimension_semantics = [#tpu.dimension_semantics<parallel>], iteration_bounds = array<i64: 2>, scalar_prefetch = 0 : i64, scratch_operands = 3 : i64, tpu.core_type = #tpu.core_type<tc>, window_params = [{transform_indices = @transform_0, window_bounds = array<i64: 1, 16, 4>}, {pipeline_mode = #tpu.pipeline_mode<synchronous>, transform_indices = @transform_1, window_bounds = array<i64: 4, 32>}, {pipeline_mode = #tpu.pipeline_mode<synchronous>, transform_indices = @transform_2, window_bounds = array<i64: 1, 32>}, {pipeline_mode = #tpu.pipeline_mode<synchronous>, transform_indices = @transform_3, window_bounds = array<i64: 32, 64>}, {pipeline_mode = #tpu.pipeline_mode<synchronous>, transform_indices = @transform_4, window_bounds = array<i64: 1, 64>}, {pipeline_mode = #tpu.pipeline_mode<synchronous>, transform_indices = @transform_5, window_bounds = array<i64: 128, 192>}, {pipeline_mode = #tpu.pipeline_mode<synchronous>, transform_indices = @transform_6, window_bounds = array<i64: 1, 192>}, {pipeline_mode = #tpu.pipeline_mode<synchronous>, transform_indices = @transform_7, window_bounds = array<i64: 128, 128>}, {pipeline_mode = #tpu.pipeline_mode<synchronous>, transform_indices = @transform_8, window_bounds = array<i64: 1, 128>}, {pipeline_mode = #tpu.pipeline_mode<synchronous>, transform_indices = @transform_9, window_bounds = array<i64: 128, 256>}, {pipeline_mode = #tpu.pipeline_mode<synchronous>, transform_indices = @transform_10, window_bounds = array<i64: 1, 256>}, {pipeline_mode = #tpu.pipeline_mode<synchronous>, transform_indices = @transform_11, window_bounds = array<i64: 256, 256>}, {pipeline_mode = #tpu.pipeline_mode<synchronous>, transform_indices = @transform_12, window_bounds = array<i64: 1, 256>}, {pipeline_mode = #tpu.pipeline_mode<synchronous>, transform_indices = @transform_13, window_bounds = array<i64: 256, 1>}, {pipeline_mode = #tpu.pipeline_mode<synchronous>, transform_indices = @transform_14, window_bounds = array<i64: 1, 1>}, {transform_indices = @transform_15, window_bounds = array<i64: 1>}, {transform_indices = @transform_16, window_bounds = array<i64: 1, 1, 1>}]} {
    %c0 = arith.constant 0 : index
    %c0_0 = arith.constant 0 : index
    %c0_1 = arith.constant 0 : index
    %0 = vector.load %arg1[%c0, %c0_0, %c0_1] : memref<1x16x4xf32, #tpu.memory_space<vmem>>, vector<1x16x4xf32>
    %1 = vector.shape_cast %0 : vector<1x16x4xf32> to vector<16x4xf32>
    %c0_2 = arith.constant 0 : index
    %c0_3 = arith.constant 0 : index
    %2 = vector.load %arg2[%c0_2, %c0_3] : memref<4x32xf32, #tpu.memory_space<vmem>>, vector<4x32xf32>
    %cst = arith.constant dense<0.000000e+00> : vector<16x32xf32>
    %3 = tpu.matmul %1, %2, %cst {dimension_numbers = #tpu.dot_dimension_numbers<[1], [0], [0], [1], [0, 0, 1, 1], [], []>} : vector<16x4xf32>, vector<4x32xf32>, vector<16x32xf32> -> vector<16x32xf32>
    %c0_4 = arith.constant 0 : index
    %c0_5 = arith.constant 0 : index
    %4 = vector.load %arg3[%c0_4, %c0_5] : memref<1x32xf32, #tpu.memory_space<vmem>>, vector<1x32xf32>
    %5 = vector.broadcast %4 : vector<1x32xf32> to vector<16x32xf32>
    %6 = arith.addf %3, %5 : vector<16x32xf32>
    %cst_6 = arith.constant 0.000000e+00 : f32
    %7 = vector.broadcast %cst_6 : f32 to vector<16x32xf32>
    %8 = arith.maximumf %6, %7 : vector<16x32xf32>
    %9 = arith.truncf %8 : vector<16x32xf32> to vector<16x32xbf16>
    %c0_7 = arith.constant 0 : index
    %c0_8 = arith.constant 0 : index
    %10 = vector.load %arg4[%c0_7, %c0_8] : memref<32x64xbf16, #tpu.memory_space<vmem>>, vector<32x64xbf16>
    %cst_9 = arith.constant dense<0.000000e+00> : vector<16x64xf32>
    %11 = tpu.matmul %9, %10, %cst_9 {dimension_numbers = #tpu.dot_dimension_numbers<[1], [0], [0], [1], [0, 0, 1, 1], [], []>} : vector<16x32xbf16>, vector<32x64xbf16>, vector<16x64xf32> -> vector<16x64xf32>
    %c0_10 = arith.constant 0 : index
    %c0_11 = arith.constant 0 : index
    %12 = vector.load %arg5[%c0_10, %c0_11] : memref<1x64xf32, #tpu.memory_space<vmem>>, vector<1x64xf32>
    %13 = vector.broadcast %12 : vector<1x64xf32> to vector<16x64xf32>
    %14 = arith.addf %11, %13 : vector<16x64xf32>
    %15 = arith.truncf %14 : vector<16x64xf32> to vector<16x64xbf16>
    %cst_12 = arith.constant dense<0xFF800000> : vector<64xf32>
    %16 = vector.multi_reduction <maximumf>, %14, %cst_12 [0] : vector<16x64xf32> to vector<64xf32>
    %17 = vector.shape_cast %16 : vector<64xf32> to vector<1x64xf32>
    %18 = arith.truncf %17 : vector<1x64xf32> to vector<1x64xbf16>
    %c64 = arith.constant 64 : index
    %c0_13 = arith.constant 0 : index
    %19 = vector.load %arg6[%c64, %c0_13] : memref<128x192xbf16, #tpu.memory_space<vmem>>, vector<64x192xbf16>
    %cst_14 = arith.constant dense<0.000000e+00> : vector<1x192xf32>
    %20 = tpu.matmul %18, %19, %cst_14 {dimension_numbers = #tpu.dot_dimension_numbers<[1], [0], [0], [1], [0, 0, 1, 1], [], []>} : vector<1x64xbf16>, vector<64x192xbf16>, vector<1x192xf32> -> vector<1x192xf32>
    %c0_15 = arith.constant 0 : index
    %c0_16 = arith.constant 0 : index
    %21 = vector.load %arg7[%c0_15, %c0_16] : memref<1x192xf32, #tpu.memory_space<vmem>>, vector<1x192xf32>
    %22 = arith.addf %20, %21 : vector<1x192xf32>
    %c0_17 = arith.constant 0 : index
    %c0_18 = arith.constant 0 : index
    %23 = vector.load %arg6[%c0_17, %c0_18] : memref<128x192xbf16, #tpu.memory_space<vmem>>, vector<64x192xbf16>
    %cst_19 = arith.constant dense<0.000000e+00> : vector<16x192xf32>
    %24 = tpu.matmul %15, %23, %cst_19 {dimension_numbers = #tpu.dot_dimension_numbers<[1], [0], [0], [1], [0, 0, 1, 1], [], []>} : vector<16x64xbf16>, vector<64x192xbf16>, vector<16x192xf32> -> vector<16x192xf32>
    %25 = vector.broadcast %22 : vector<1x192xf32> to vector<16x192xf32>
    %26 = arith.addf %24, %25 : vector<16x192xf32>
    %cst_20 = arith.constant 0.000000e+00 : f32
    %27 = vector.broadcast %cst_20 : f32 to vector<16x192xf32>
    %28 = arith.maximumf %26, %27 : vector<16x192xf32>
    %29 = vector.extract_strided_slice %28 {offsets = [0, 0], sizes = [16, 32], strides = [1, 1]} : vector<16x192xf32> to vector<16x32xf32>
    %30 = tpu.transpose %29, [1, 0] : vector<16x32xf32> -> vector<32x16xf32>
    %31 = arith.truncf %30 : vector<32x16xf32> to vector<32x16xbf16>
    %32 = vector.extract_strided_slice %28 {offsets = [0, 32], sizes = [16, 32], strides = [1, 1]} : vector<16x192xf32> to vector<16x32xf32>
    %33 = arith.truncf %32 : vector<16x32xf32> to vector<16x32xbf16>
    %c0_21 = arith.constant 0 : index
    %c0_22 = arith.constant 0 : index
    %34 = vector.load %arg19[%c0_21, %c0_22] : memref<16x32xbf16, #tpu.memory_space<vmem>>, vector<16x32xbf16>
    tpu.vector_store %arg19[%c0_21, %c0_22], %33 {strides = array<i32>} : memref<16x32xbf16, #tpu.memory_space<vmem>>, vector<16x32xbf16>,
    %35 = vector.extract_strided_slice %28 {offsets = [0, 64], sizes = [16, 128], strides = [1, 1]} : vector<16x192xf32> to vector<16x128xf32>
    %36 = arith.truncf %35 : vector<16x128xf32> to vector<16x128xbf16>
    %c0_23 = arith.constant 0 : index
    %c0_24 = arith.constant 0 : index
    %37 = vector.load %arg20[%c0_23, %c0_24] : memref<16x128xbf16, #tpu.memory_space<vmem>>, vector<16x128xbf16>
    tpu.vector_store %arg20[%c0_23, %c0_24], %36 {strides = array<i32>} : memref<16x128xbf16, #tpu.memory_space<vmem>>, vector<16x128xbf16>,
    %cst_25 = arith.constant 0.000000e+00 : f32
    %38 = vector.broadcast %cst_25 : f32 to vector<16x128xf32>
    %c0_26 = arith.constant 0 : index
    %c0_27 = arith.constant 0 : index
    %39 = vector.load %arg18[%c0_26, %c0_27] : memref<16x128xf32, #tpu.memory_space<vmem>>, vector<16x128xf32>
    tpu.vector_store %arg18[%c0_26, %c0_27], %38 {strides = array<i32>} : memref<16x128xf32, #tpu.memory_space<vmem>>, vector<16x128xf32>,
    %c0_i32 = arith.constant 0 : i32
    %c1_i32 = arith.constant 1 : i32
    %40 = arith.muli %c0_i32, %c1_i32 : i32
    %c0_i32_28 = arith.constant 0 : i32
    %41 = arith.addi %c0_i32_28, %40 : i32
    %c16_i32 = arith.constant 16 : i32
    %42 = arith.muli %41, %c16_i32 : i32
    %43 = tpu.assume_multiple %42, 16 : i32
    %44 = arith.index_cast %43 : i32 to index
    %c0_29 = arith.constant 0 : index
    %45 = vector.load %arg19[%44, %c0_29] : memref<16x32xbf16, #tpu.memory_space<vmem>>, vector<16x32xbf16>
    %46 = arith.index_cast %43 : i32 to index
    %c0_30 = arith.constant 0 : index
    %47 = vector.load %arg20[%46, %c0_30] : memref<16x128xbf16, #tpu.memory_space<vmem>>, vector<16x128xbf16>
    %cst_31 = arith.constant dense<0.000000e+00> : vector<16x16xf32>
    %48 = tpu.matmul %45, %31, %cst_31 {dimension_numbers = #tpu.dot_dimension_numbers<[1], [0], [0], [1], [0, 0, 1, 1], [], []>} : vector<16x32xbf16>, vector<32x16xbf16>, vector<16x16xf32> -> vector<16x16xf32>
    %cst_32 = arith.constant dense<0xFF800000> : vector<16xf32>
    %49 = vector.multi_reduction <maximumf>, %48, %cst_32 [1] : vector<16x16xf32> to vector<16xf32>
    %50 = vector.shape_cast %49 : vector<16xf32> to vector<16x1xf32>
    %51 = vector.broadcast %50 : vector<16x1xf32> to vector<16x16xf32>
    %52 = arith.subf %48, %51 : vector<16x16xf32>
    %53 = math.exp %52 : vector<16x16xf32>
    %cst_33 = arith.constant dense<0.000000e+00> : vector<16xf32>
    %54 = vector.multi_reduction <add>, %53, %cst_33 [1] : vector<16x16xf32> to vector<16xf32>
    %55 = vector.shape_cast %54 : vector<16xf32> to vector<16x1xf32>
    %56 = tpu.reciprocal %55 {approx = true} : vector<16x1xf32> -> vector<16x1xf32>
    %57 = vector.broadcast %56 : vector<16x1xf32> to vector<16x16xf32>
    %58 = arith.mulf %53, %57 : vector<16x16xf32>
    %59 = arith.truncf %58 : vector<16x16xf32> to vector<16x16xbf16>
    %c0_34 = arith.constant 0 : index
    %c0_35 = arith.constant 0 : index
    %60 = vector.load %arg18[%c0_34, %c0_35] : memref<16x128xf32, #tpu.memory_space<vmem>>, vector<16x128xf32>
    %cst_36 = arith.constant dense<0.000000e+00> : vector<16x128xf32>
    %61 = tpu.matmul %59, %47, %cst_36 {dimension_numbers = #tpu.dot_dimension_numbers<[0], [0], [1], [1], [0, 1, 1, 1], [], []>} : vector<16x16xbf16>, vector<16x128xbf16>, vector<16x128xf32> -> vector<16x128xf32>
    %62 = arith.addf %60, %61 : vector<16x128xf32>
    %c0_37 = arith.constant 0 : index
    %c0_38 = arith.constant 0 : index
    %63 = vector.load %arg18[%c0_37, %c0_38] : memref<16x128xf32, #tpu.memory_space<vmem>>, vector<16x128xf32>
    tpu.vector_store %arg18[%c0_37, %c0_38], %62 {strides = array<i32>} : memref<16x128xf32, #tpu.memory_space<vmem>>, vector<16x128xf32>,
    %c1_i32_39 = arith.constant 1 : i32
    %c0_40 = arith.constant 0 : index
    %64 = memref.load %arg16[%c0_40] : memref<1xf32, #tpu.memory_space<smem>>
    %c0_41 = arith.constant 0 : index
    %c0_42 = arith.constant 0 : index
    %65 = vector.load %arg18[%c0_41, %c0_42] : memref<16x128xf32, #tpu.memory_space<vmem>>, vector<16x128xf32>
    %66 = vector.broadcast %64 : f32 to vector<16x128xf32>
    %67 = arith.mulf %66, %65 : vector<16x128xf32>
    %68 = arith.truncf %67 : vector<16x128xf32> to vector<16x128xbf16>
    %c64_43 = arith.constant 64 : index
    %c0_44 = arith.constant 0 : index
    %69 = vector.load %arg8[%c64_43, %c0_44] : memref<128x128xbf16, #tpu.memory_space<vmem>>, vector<64x128xbf16>
    %cst_45 = arith.constant dense<0.000000e+00> : vector<1x128xf32>
    %70 = tpu.matmul %18, %69, %cst_45 {dimension_numbers = #tpu.dot_dimension_numbers<[1], [0], [0], [1], [0, 0, 1, 1], [], []>} : vector<1x64xbf16>, vector<64x128xbf16>, vector<1x128xf32> -> vector<1x128xf32>
    %c0_46 = arith.constant 0 : index
    %c0_47 = arith.constant 0 : index
    %71 = vector.load %arg9[%c0_46, %c0_47] : memref<1x128xf32, #tpu.memory_space<vmem>>, vector<1x128xf32>
    %72 = arith.addf %70, %71 : vector<1x128xf32>
    %c0_48 = arith.constant 0 : index
    %c0_49 = arith.constant 0 : index
    %73 = vector.load %arg8[%c0_48, %c0_49] : memref<128x128xbf16, #tpu.memory_space<vmem>>, vector<128x128xbf16>
    %cst_50 = arith.constant dense<0.000000e+00> : vector<16x128xf32>
    %74 = tpu.matmul %68, %73, %cst_50 {dimension_numbers = #tpu.dot_dimension_numbers<[1], [0], [0], [1], [0, 0, 1, 1], [], []>} : vector<16x128xbf16>, vector<128x128xbf16>, vector<16x128xf32> -> vector<16x128xf32>
    %c0_51 = arith.constant 0 : index
    %c0_52 = arith.constant 0 : index
    %75 = vector.load %arg8[%c0_51, %c0_52] : memref<128x128xbf16, #tpu.memory_space<vmem>>, vector<64x128xbf16>
    %cst_53 = arith.constant dense<0.000000e+00> : vector<16x128xf32>
    %76 = tpu.matmul %15, %75, %cst_53 {dimension_numbers = #tpu.dot_dimension_numbers<[1], [0], [0], [1], [0, 0, 1, 1], [], []>} : vector<16x64xbf16>, vector<64x128xbf16>, vector<16x128xf32> -> vector<16x128xf32>
    %77 = arith.addf %74, %76 : vector<16x128xf32>
    %78 = vector.broadcast %72 : vector<1x128xf32> to vector<16x128xf32>
    %79 = arith.addf %77, %78 : vector<16x128xf32>
    %cst_54 = arith.constant 0.000000e+00 : f32
    %80 = vector.broadcast %cst_54 : f32 to vector<16x128xf32>
    %81 = arith.maximumf %79, %80 : vector<16x128xf32>
    %82 = arith.truncf %81 : vector<16x128xf32> to vector<16x128xbf16>
    %c0_55 = arith.constant 0 : index
    %c0_56 = arith.constant 0 : index
    %83 = vector.load %arg10[%c0_55, %c0_56] : memref<128x256xbf16, #tpu.memory_space<vmem>>, vector<128x256xbf16>
    %cst_57 = arith.constant dense<0.000000e+00> : vector<16x256xf32>
    %84 = tpu.matmul %82, %83, %cst_57 {dimension_numbers = #tpu.dot_dimension_numbers<[1], [0], [0], [1], [0, 0, 1, 1], [], []>} : vector<16x128xbf16>, vector<128x256xbf16>, vector<16x256xf32> -> vector<16x256xf32>
    %c0_58 = arith.constant 0 : index
    %c0_59 = arith.constant 0 : index
    %85 = vector.load %arg11[%c0_58, %c0_59] : memref<1x256xf32, #tpu.memory_space<vmem>>, vector<1x256xf32>
    %86 = vector.broadcast %85 : vector<1x256xf32> to vector<16x256xf32>
    %87 = arith.addf %84, %86 : vector<16x256xf32>
    %cst_60 = arith.constant dense<0xFF800000> : vector<256xf32>
    %88 = vector.multi_reduction <maximumf>, %87, %cst_60 [0] : vector<16x256xf32> to vector<256xf32>
    %89 = vector.shape_cast %88 : vector<256xf32> to vector<1x256xf32>
    %90 = arith.truncf %89 : vector<1x256xf32> to vector<1x256xbf16>
    %c0_61 = arith.constant 0 : index
    %c0_62 = arith.constant 0 : index
    %91 = vector.load %arg12[%c0_61, %c0_62] : memref<256x256xbf16, #tpu.memory_space<vmem>>, vector<256x256xbf16>
    %cst_63 = arith.constant dense<0.000000e+00> : vector<1x256xf32>
    %92 = tpu.matmul %90, %91, %cst_63 {dimension_numbers = #tpu.dot_dimension_numbers<[1], [0], [0], [1], [0, 0, 1, 1], [], []>} : vector<1x256xbf16>, vector<256x256xbf16>, vector<1x256xf32> -> vector<1x256xf32>
    %c0_64 = arith.constant 0 : index
    %c0_65 = arith.constant 0 : index
    %93 = vector.load %arg13[%c0_64, %c0_65] : memref<1x256xf32, #tpu.memory_space<vmem>>, vector<1x256xf32>
    %94 = arith.addf %92, %93 : vector<1x256xf32>
    %cst_66 = arith.constant 0.000000e+00 : f32
    %95 = vector.broadcast %cst_66 : f32 to vector<1x256xf32>
    %96 = arith.maximumf %94, %95 : vector<1x256xf32>
    %97 = arith.truncf %96 : vector<1x256xf32> to vector<1x256xbf16>
    %c0_67 = arith.constant 0 : index
    %c0_68 = arith.constant 0 : index
    %98 = vector.load %arg14[%c0_67, %c0_68] : memref<256x1xbf16, #tpu.memory_space<vmem>>, vector<256x1xbf16>
    %cst_69 = arith.constant dense<0.000000e+00> : vector<1x1xf32>
    %99 = tpu.matmul %97, %98, %cst_69 {dimension_numbers = #tpu.dot_dimension_numbers<[1], [0], [0], [1], [0, 0, 1, 1], [], []>} : vector<1x256xbf16>, vector<256x1xbf16>, vector<1x1xf32> -> vector<1x1xf32>
    %c0_70 = arith.constant 0 : index
    %c0_71 = arith.constant 0 : index
    %100 = vector.load %arg15[%c0_70, %c0_71] : memref<1x1xf32, #tpu.memory_space<vmem>>, vector<1x1xf32>
    %101 = arith.addf %99, %100 : vector<1x1xf32>
    %102 = vector.shape_cast %101 : vector<1x1xf32> to vector<1x1x1xf32>
    %c0_72 = arith.constant 0 : index
    %c0_73 = arith.constant 0 : index
    %c0_74 = arith.constant 0 : index
    %103 = vector.load %arg17[%c0_72, %c0_73, %c0_74] : memref<1x1x1xf32, #tpu.memory_space<vmem>>, vector<1x1x1xf32>
    tpu.vector_store %arg17[%c0_72, %c0_73, %c0_74], %102 {strides = array<i32>} : memref<1x1x1xf32, #tpu.memory_space<vmem>>, vector<1x1x1xf32>,
    return
  }
  func.func @transform_0(%arg0: i32) -> (i32, i32, i32) {
    %c0_i32 = arith.constant 0 : i32
    %c0_i32_0 = arith.constant 0 : i32
    %c0_i32_1 = arith.constant 0 : i32
    return %arg0, %c0_i32, %c0_i32_0 : i32, i32, i32
  }
  func.func @transform_1(%arg0: i32) -> (i32, i32) {
    %c0_i32 = arith.constant 0 : i32
    %c0_i32_0 = arith.constant 0 : i32
    %c0_i32_1 = arith.constant 0 : i32
    return %c0_i32, %c0_i32_0 : i32, i32
  }
  func.func @transform_2(%arg0: i32) -> (i32, i32) {
    %c0_i32 = arith.constant 0 : i32
    %c0_i32_0 = arith.constant 0 : i32
    %c0_i32_1 = arith.constant 0 : i32
    return %c0_i32, %c0_i32_0 : i32, i32
  }
  func.func @transform_3(%arg0: i32) -> (i32, i32) {
    %c0_i32 = arith.constant 0 : i32
    %c0_i32_0 = arith.constant 0 : i32
    %c0_i32_1 = arith.constant 0 : i32
    return %c0_i32, %c0_i32_0 : i32, i32
  }
  func.func @transform_4(%arg0: i32) -> (i32, i32) {
    %c0_i32 = arith.constant 0 : i32
    %c0_i32_0 = arith.constant 0 : i32
    %c0_i32_1 = arith.constant 0 : i32
    return %c0_i32, %c0_i32_0 : i32, i32
  }
  func.func @transform_5(%arg0: i32) -> (i32, i32) {
    %c0_i32 = arith.constant 0 : i32
    %c0_i32_0 = arith.constant 0 : i32
    %c0_i32_1 = arith.constant 0 : i32
    return %c0_i32, %c0_i32_0 : i32, i32
  }
  func.func @transform_6(%arg0: i32) -> (i32, i32) {
    %c0_i32 = arith.constant 0 : i32
    %c0_i32_0 = arith.constant 0 : i32
    %c0_i32_1 = arith.constant 0 : i32
    return %c0_i32, %c0_i32_0 : i32, i32
  }
  func.func @transform_7(%arg0: i32) -> (i32, i32) {
    %c0_i32 = arith.constant 0 : i32
    %c0_i32_0 = arith.constant 0 : i32
    %c0_i32_1 = arith.constant 0 : i32
    return %c0_i32, %c0_i32_0 : i32, i32
  }
  func.func @transform_8(%arg0: i32) -> (i32, i32) {
    %c0_i32 = arith.constant 0 : i32
    %c0_i32_0 = arith.constant 0 : i32
    %c0_i32_1 = arith.constant 0 : i32
    return %c0_i32, %c0_i32_0 : i32, i32
  }
  func.func @transform_9(%arg0: i32) -> (i32, i32) {
    %c0_i32 = arith.constant 0 : i32
    %c0_i32_0 = arith.constant 0 : i32
    %c0_i32_1 = arith.constant 0 : i32
    return %c0_i32, %c0_i32_0 : i32, i32
  }
  func.func @transform_10(%arg0: i32) -> (i32, i32) {
    %c0_i32 = arith.constant 0 : i32
    %c0_i32_0 = arith.constant 0 : i32
    %c0_i32_1 = arith.constant 0 : i32
    return %c0_i32, %c0_i32_0 : i32, i32
  }
  func.func @transform_11(%arg0: i32) -> (i32, i32) {
    %c0_i32 = arith.constant 0 : i32
    %c0_i32_0 = arith.constant 0 : i32
    %c0_i32_1 = arith.constant 0 : i32
    return %c0_i32, %c0_i32_0 : i32, i32
  }
  func.func @transform_12(%arg0: i32) -> (i32, i32) {
    %c0_i32 = arith.constant 0 : i32
    %c0_i32_0 = arith.constant 0 : i32
    %c0_i32_1 = arith.constant 0 : i32
    return %c0_i32, %c0_i32_0 : i32, i32
  }
  func.func @transform_13(%arg0: i32) -> (i32, i32) {
    %c0_i32 = arith.constant 0 : i32
    %c0_i32_0 = arith.constant 0 : i32
    %c0_i32_1 = arith.constant 0 : i32
    return %c0_i32, %c0_i32_0 : i32, i32
  }
  func.func @transform_14(%arg0: i32) -> (i32, i32) {
    %c0_i32 = arith.constant 0 : i32
    %c0_i32_0 = arith.constant 0 : i32
    %c0_i32_1 = arith.constant 0 : i32
    return %c0_i32, %c0_i32_0 : i32, i32
  }
  func.func @transform_15(%arg0: i32) -> i32 {
    %c0_i32 = arith.constant 0 : i32
    %c0_i32_0 = arith.constant 0 : i32
    return %c0_i32 : i32
  }
  func.func @transform_16(%arg0: i32) -> (i32, i32, i32) {
    %c0_i32 = arith.constant 0 : i32
    %c0_i32_0 = arith.constant 0 : i32
    %c0_i32_1 = arith.constant 0 : i32
    return %arg0, %c0_i32, %c0_i32_0 : i32, i32, i32
  }
}

</mosaic_0001>

<llo_original>
// kernel: tpu_custom_call.1
$region0: #{tpu_custom_call.1}
  #allocation0 [shape = 'u32[]', space=smem, size = 0x4, offset = 0x4, fixed_abs, tag = 'smem constant byte address 0x4 - core index']
  #allocation1 [shape = 'u32[144,128]{1,0:T(1,128)}', space=vmem, size = 0x12000, scoped, tag = 'internal scratch']
  #allocation2 [shape = 'f32[16,128]{1,0:T(8,128)}', space=vmem, size = 0x2000, scoped, tag = 'scratch operand']
  #allocation3 [shape = 'bf16[16,32]{1,0:T(16,128)(2,1)}', space=vmem, size = 0x1000, scoped, tag = 'scratch operand']
  #allocation4 [shape = 'bf16[16,128]{1,0:T(16,128)(2,1)}', space=vmem, size = 0x1000, scoped, tag = 'scratch operand']
  #allocation5 [shape = 'f32[1,1]{1,0:T(1,128)S(1)}', space=vmem, size = 0x200, scoped, tag = 'scoped memory for tpu_custom_call.1']
  #allocation6 [shape = 'f32[1]{0:T(128)S(6)}', space=smem, size = 0x200, scoped, tag = 'scoped memory for tpu_custom_call.1']
  %s0 = inlined_call_operand.vmem [shape: f32[2,16,4], index: 0, kind: input, shape index: {}]
  %s1 = inlined_call_operand.vmem [shape: f32[4,32], index: 1, kind: input, shape index: {}]
  %s2 = inlined_call_operand.vmem [shape: f32[1,32], index: 2, kind: input, shape index: {}]
  %s3 = inlined_call_operand.vmem [shape: bf16[32,64], index: 3, kind: input, shape index: {}]
  %s4 = inlined_call_operand.vmem [shape: f32[1,64], index: 4, kind: input, shape index: {}]
  %s5 = inlined_call_operand.vmem [shape: bf16[128,192], index: 5, kind: input, shape index: {}]
  %s6 = inlined_call_operand.vmem [shape: f32[1,192], index: 6, kind: input, shape index: {}]
  %s7 = inlined_call_operand.hbm [shape: bf16[128,128], index: 7, kind: input, shape index: {}]
  %s8 = inlined_call_operand.vmem [shape: f32[1,128], index: 8, kind: input, shape index: {}]
  %s9 = inlined_call_operand.vmem [shape: bf16[128,256], index: 9, kind: input, shape index: {}]
  %s10 = inlined_call_operand.vmem [shape: f32[1,256], index: 10, kind: input, shape index: {}]
  %s11 = inlined_call_operand.vmem [shape: bf16[256,256], index: 11, kind: input, shape index: {}]
  %s12 = inlined_call_operand.vmem [shape: f32[1,256], index: 12, kind: input, shape index: {}]
  %s13 = inlined_call_operand.vmem [shape: bf16[256,1], index: 13, kind: input, shape index: {}]
  %s14 = inlined_call_operand.<no memory space> [shape: f32[1,1], index: 14, kind: input, shape index: {}]
  %s15 = inlined_call_operand.<no memory space> [shape: f32[1], index: 15, kind: input, shape index: {}]
  %s16 = inlined_call_operand.vmem [shape: f32[2,1,1], index: 16, kind: output, shape index: {}]
  %s17 = sld [smem:[#allocation0]]
  $region101: #{tpu_custom_call.1} parent=0
    _
  %s19 = ssub.s32 1, %s17
  %s20 = scalar_select 0, %s19, %s17
  %v21 = vstv %s14
  %22 = vst [vmem:[#allocation5] sm:$0x1] %v21
  %23 = sst [smem:[#allocation6]] %s15
  $region1: #{tpu_custom_call.1} parent=0
    #allocation7 [shape = 'u8[32768]{0}', space=vmem, size = 0x8000, scoped, tag = 'input window, operand 7, single buffered']
    #allocation8 [shape = 's32[2]{0}', space=sflag, size = 0x8, scoped, tag = 'scoped memory for tpu_custom_call.1']
    %24 = vsyncpa [#allocation8], 0
    loop: start=0, step=1, limit=4
    $region2: #{tpu_custom_call.1} parent=1 // loop_pre_header
      _
    $region3: #{tpu_custom_call.1} parent=1 // loop_header
      %s26 = sphi 0, %s30
      %p27 = scmp.ge.s32.totalorder %s26, 4
      %s36 = sphi 0, %s38
      %s39 = sphi 0, %s36
      %s40 = sphi 0, %s39
      %s56 = sphi 0, %s40
      %s60 = sphi 0, %s60
      %s62 = sphi 0, %s60
      %s63 = sphi 0, %s62
      %s77 = sphi 0, %s63
      %s81 = sphi 0, %s81
      %s83 = sphi 0, %s81
      %s84 = sphi 0, %s83
      %s98 = sphi 0, %s84
      %s102 = sphi 0, %s102
      %s104 = sphi 0, %s102
      %s105 = sphi 0, %s104
      %s119 = sphi 0, %s105
      %s123 = sphi 0, %s123
      %s125 = sphi 0, %s123
      %s126 = sphi 0, %s125
      %s140 = sphi 0, %s126
      %s144 = sphi 0, %s144
      %s146 = sphi 0, %s144
      %s147 = sphi 0, %s146
      %s161 = sphi 0, %s147
      %s165 = sphi 0, %s165
      %s167 = sphi 0, %s165
      %s168 = sphi 0, %s167
      %s182 = sphi 0, %s168
      %s186 = sphi 0, %s186
      %s188 = sphi 0, %s186
      %s189 = sphi 0, %s188
      %s203 = sphi 0, %s189
      %s207 = sphi 0, %s207
      %s209 = sphi 0, %s207
      %s210 = sphi 0, %s209
      %s224 = sphi 0, %s210
      %s228 = sphi 0, %s228
      %s230 = sphi 0, %s228
      %s231 = sphi 0, %s230
      %s245 = sphi 0, %s231
      %s249 = sphi 0, %s249
      %s251 = sphi 0, %s249
      %s252 = sphi 0, %s251
      %s266 = sphi 0, %s252
      %s270 = sphi 0, %s270
      %s272 = sphi 0, %s270
      %s273 = sphi 0, %s272
      %s287 = sphi 0, %s273
      %s291 = sphi 0, %s291
      %s293 = sphi 0, %s291
      %s294 = sphi 0, %s293
      %s308 = sphi 0, %s294
      %s312 = sphi 0, %s312
      %s314 = sphi 0, %s312
      %s315 = sphi 0, %s314
      %s329 = sphi 0, %s315
      %s333 = sphi 0, %s333
      %s335 = sphi 0, %s333
      %s336 = sphi 0, %s335
      %s350 = sphi 0, %s336
      %s354 = sphi 0, %s354
      %s356 = sphi 0, %s354
      %s357 = sphi 0, %s356
      %s371 = sphi 0, %s357
      %s377 = sphi 0, %s379
      %s380 = sphi 0, %s377
      %s381 = sphi 0, %s380
      %s397 = sphi 0, %s381
    $region4: #{tpu_custom_call.1} parent=1 // loop_header_branch
      %29 = sbr.rel (%p27) target = $region8
    $region5: #{tpu_custom_call.1} parent=1 // loop_body
      %s31 = ssub.s32 %s26, 1
      %s32 = ssub.s32 %s26, 2
      %s33 = sadd.s32 %s26, 1
      %s34 = ssub.s32 %s26, %s33
      %p35 = scmp.eq.s32.totalorder %s34, 0
      %s37 = sadd.s32 %s36, 1
      %s38 = scalar_select %p35, %s36, %s37
      %p41 = pneg %p35
      %p42 = scmp.eq.s32.totalorder %s26, 1
      %p43 = por %p41, %p42
      %p44 = scmp.ne.s32.totalorder %s36, %s39
      %p45 = scmp.eq.s32.totalorder %s26, 0
      %p46 = por %p44, %p45
      %p47 = scmp.ne.s32.totalorder %s36, %s39
      %p48 = scmp.eq.s32.totalorder %s31, 1
      %p49 = por %p47, %p48
      %p50 = scmp.ne.s32.totalorder %s39, %s40
      %p51 = scmp.eq.s32.totalorder %s31, 0
      %p52 = por %p50, %p51
      %p53 = scmp.ne.s32.totalorder %s39, %s40
      %p54 = scmp.eq.s32.totalorder %s32, 1
      %p55 = por %p53, %p54
      %p57 = scmp.ne.s32.totalorder %s40, %s56
      %p58 = scmp.eq.s32.totalorder %s32, 0
      %p59 = por %p57, %p58
      %s61 = sadd.s32 %s60, 1
      %p64 = scmp.eq.s32.totalorder %s26, 1
      %p65 = scmp.ne.s32.totalorder %s60, %s62
      %p66 = scmp.eq.s32.totalorder %s26, 0
      %p67 = por %p65, %p66
      %p68 = scmp.ne.s32.totalorder %s60, %s62
      %p69 = scmp.eq.s32.totalorder %s31, 1
      %p70 = por %p68, %p69
      %p71 = scmp.ne.s32.totalorder %s62, %s63
      %p72 = scmp.eq.s32.totalorder %s31, 0
      %p73 = por %p71, %p72
      %p74 = scmp.ne.s32.totalorder %s62, %s63
      %p75 = scmp.eq.s32.totalorder %s32, 1
      %p76 = por %p74, %p75
      %p78 = scmp.ne.s32.totalorder %s63, %s77
      %p79 = scmp.eq.s32.totalorder %s32, 0
      %p80 = por %p78, %p79
      %s82 = sadd.s32 %s81, 1
      %p85 = scmp.eq.s32.totalorder %s26, 1
      %p86 = scmp.ne.s32.totalorder %s81, %s83
      %p87 = scmp.eq.s32.totalorder %s26, 0
      %p88 = por %p86, %p87
      %p89 = scmp.ne.s32.totalorder %s81, %s83
      %p90 = scmp.eq.s32.totalorder %s31, 1
      %p91 = por %p89, %p90
      %p92 = scmp.ne.s32.totalorder %s83, %s84
      %p93 = scmp.eq.s32.totalorder %s31, 0
      %p94 = por %p92, %p93
      %p95 = scmp.ne.s32.totalorder %s83, %s84
      %p96 = scmp.eq.s32.totalorder %s32, 1
      %p97 = por %p95, %p96
      %p99 = scmp.ne.s32.totalorder %s84, %s98
      %p100 = scmp.eq.s32.totalorder %s32, 0
      %p101 = por %p99, %p100
      %s103 = sadd.s32 %s102, 1
      %p106 = scmp.eq.s32.totalorder %s26, 1
      %p107 = scmp.ne.s32.totalorder %s102, %s104
      %p108 = scmp.eq.s32.totalorder %s26, 0
      %p109 = por %p107, %p108
      %p110 = scmp.ne.s32.totalorder %s102, %s104
      %p111 = scmp.eq.s32.totalorder %s31, 1
      %p112 = por %p110, %p111
      %p113 = scmp.ne.s32.totalorder %s104, %s105
      %p114 = scmp.eq.s32.totalorder %s31, 0
      %p115 = por %p113, %p114
      %p116 = scmp.ne.s32.totalorder %s104, %s105
      %p117 = scmp.eq.s32.totalorder %s32, 1
      %p118 = por %p116, %p117
      %p120 = scmp.ne.s32.totalorder %s105, %s119
      %p121 = scmp.eq.s32.totalorder %s32, 0
      %p122 = por %p120, %p121
      %s124 = sadd.s32 %s123, 1
      %p127 = scmp.eq.s32.totalorder %s26, 1
      %p128 = scmp.ne.s32.totalorder %s123, %s125
      %p129 = scmp.eq.s32.totalorder %s26, 0
      %p130 = por %p128, %p129
      %p131 = scmp.ne.s32.totalorder %s123, %s125
      %p132 = scmp.eq.s32.totalorder %s31, 1
      %p133 = por %p131, %p132
      %p134 = scmp.ne.s32.totalorder %s125, %s126
      %p135 = scmp.eq.s32.totalorder %s31, 0
      %p136 = por %p134, %p135
      %p137 = scmp.ne.s32.totalorder %s125, %s126
      %p138 = scmp.eq.s32.totalorder %s32, 1
      %p139 = por %p137, %p138
      %p141 = scmp.ne.s32.totalorder %s126, %s140
      %p142 = scmp.eq.s32.totalorder %s32, 0
      %p143 = por %p141, %p142
      %s145 = sadd.s32 %s144, 1
      %p148 = scmp.eq.s32.totalorder %s26, 1
      %p149 = scmp.ne.s32.totalorder %s144, %s146
      %p150 = scmp.eq.s32.totalorder %s26, 0
      %p151 = por %p149, %p150
      %p152 = scmp.ne.s32.totalorder %s144, %s146
      %p153 = scmp.eq.s32.totalorder %s31, 1
      %p154 = por %p152, %p153
      %p155 = scmp.ne.s32.totalorder %s146, %s147
      %p156 = scmp.eq.s32.totalorder %s31, 0
      %p157 = por %p155, %p156
      %p158 = scmp.ne.s32.totalorder %s146, %s147
      %p159 = scmp.eq.s32.totalorder %s32, 1
      %p160 = por %p158, %p159
      %p162 = scmp.ne.s32.totalorder %s147, %s161
      %p163 = scmp.eq.s32.totalorder %s32, 0
      %p164 = por %p162, %p163
      %s166 = sadd.s32 %s165, 1
      %p169 = scmp.eq.s32.totalorder %s26, 1
      %p170 = scmp.ne.s32.totalorder %s165, %s167
      %p171 = scmp.eq.s32.totalorder %s26, 0
      %p172 = por %p170, %p171
      %p173 = scmp.ne.s32.totalorder %s165, %s167
      %p174 = scmp.eq.s32.totalorder %s31, 1
      %p175 = por %p173, %p174
      %p176 = scmp.ne.s32.totalorder %s167, %s168
      %p177 = scmp.eq.s32.totalorder %s31, 0
      %p178 = por %p176, %p177
      %p179 = scmp.ne.s32.totalorder %s167, %s168
      %p180 = scmp.eq.s32.totalorder %s32, 1
      %p181 = por %p179, %p180
      %p183 = scmp.ne.s32.totalorder %s168, %s182
      %p184 = scmp.eq.s32.totalorder %s32, 0
      %p185 = por %p183, %p184
      %s187 = sadd.s32 %s186, 1
      %p190 = scmp.eq.s32.totalorder %s26, 1
      %p191 = scmp.ne.s32.totalorder %s186, %s188
      %p192 = scmp.eq.s32.totalorder %s26, 0
      %p193 = por %p191, %p192
      %p194 = scmp.ne.s32.totalorder %s186, %s188
      %p195 = scmp.eq.s32.totalorder %s31, 1
      %p196 = por %p194, %p195
      %p197 = scmp.ne.s32.totalorder %s188, %s189
      %p198 = scmp.eq.s32.totalorder %s31, 0
      %p199 = por %p197, %p198
      %p200 = scmp.ne.s32.totalorder %s188, %s189
      %p201 = scmp.eq.s32.totalorder %s32, 1
      %p202 = por %p200, %p201
      %p204 = scmp.ne.s32.totalorder %s189, %s203
      %p205 = scmp.eq.s32.totalorder %s32, 0
      %p206 = por %p204, %p205
      %s208 = sadd.s32 %s207, 1
      %p211 = scmp.eq.s32.totalorder %s26, 1
      %p212 = scmp.ne.s32.totalorder %s207, %s209
      %p213 = scmp.eq.s32.totalorder %s26, 0
      %p214 = por %p212, %p213
      %p215 = scmp.ne.s32.totalorder %s207, %s209
      %p216 = scmp.eq.s32.totalorder %s31, 1
      %p217 = por %p215, %p216
      %p218 = scmp.ne.s32.totalorder %s209, %s210
      %p219 = scmp.eq.s32.totalorder %s31, 0
      %p220 = por %p218, %p219
      %p221 = scmp.ne.s32.totalorder %s209, %s210
      %p222 = scmp.eq.s32.totalorder %s32, 1
      %p223 = por %p221, %p222
      %p225 = scmp.ne.s32.totalorder %s210, %s224
      %p226 = scmp.eq.s32.totalorder %s32, 0
      %p227 = por %p225, %p226
      %s229 = sadd.s32 %s228, 1
      %p232 = scmp.eq.s32.totalorder %s26, 1
      %p233 = scmp.ne.s32.totalorder %s228, %s230
      %p234 = scmp.eq.s32.totalorder %s26, 0
      %p235 = por %p233, %p234
      %p236 = scmp.ne.s32.totalorder %s228, %s230
      %p237 = scmp.eq.s32.totalorder %s31, 1
      %p238 = por %p236, %p237
      %p239 = scmp.ne.s32.totalorder %s230, %s231
      %p240 = scmp.eq.s32.totalorder %s31, 0
      %p241 = por %p239, %p240
      %p242 = scmp.ne.s32.totalorder %s230, %s231
      %p243 = scmp.eq.s32.totalorder %s32, 1
      %p244 = por %p242, %p243
      %p246 = scmp.ne.s32.totalorder %s231, %s245
      %p247 = scmp.eq.s32.totalorder %s32, 0
      %p248 = por %p246, %p247
      %s250 = sadd.s32 %s249, 1
      %p253 = scmp.eq.s32.totalorder %s26, 1
      %p254 = scmp.ne.s32.totalorder %s249, %s251
      %p255 = scmp.eq.s32.totalorder %s26, 0
      %p256 = por %p254, %p255
      %p257 = scmp.ne.s32.totalorder %s249, %s251
      %p258 = scmp.eq.s32.totalorder %s31, 1
      %p259 = por %p257, %p258
      %p260 = scmp.ne.s32.totalorder %s251, %s252
      %p261 = scmp.eq.s32.totalorder %s31, 0
      %p262 = por %p260, %p261
      %p263 = scmp.ne.s32.totalorder %s251, %s252
      %p264 = scmp.eq.s32.totalorder %s32, 1
      %p265 = por %p263, %p264
      %p267 = scmp.ne.s32.totalorder %s252, %s266
      %p268 = scmp.eq.s32.totalorder %s32, 0
      %p269 = por %p267, %p268
      %s271 = sadd.s32 %s270, 1
      %p274 = scmp.eq.s32.totalorder %s26, 1
      %p275 = scmp.ne.s32.totalorder %s270, %s272
      %p276 = scmp.eq.s32.totalorder %s26, 0
      %p277 = por %p275, %p276
      %p278 = scmp.ne.s32.totalorder %s270, %s272
      %p279 = scmp.eq.s32.totalorder %s31, 1
      %p280 = por %p278, %p279
      %p281 = scmp.ne.s32.totalorder %s272, %s273
      %p282 = scmp.eq.s32.totalorder %s31, 0
      %p283 = por %p281, %p282
      %p284 = scmp.ne.s32.totalorder %s272, %s273
      %p285 = scmp.eq.s32.totalorder %s32, 1
      %p286 = por %p284, %p285
      %p288 = scmp.ne.s32.totalorder %s273, %s287
      %p289 = scmp.eq.s32.totalorder %s32, 0
      %p290 = por %p288, %p289
      %s292 = sadd.s32 %s291, 1
      %p295 = scmp.eq.s32.totalorder %s26, 1
      %p296 = scmp.ne.s32.totalorder %s291, %s293
      %p297 = scmp.eq.s32.totalorder %s26, 0
      %p298 = por %p296, %p297
      %p299 = scmp.ne.s32.totalorder %s291, %s293
      %p300 = scmp.eq.s32.totalorder %s31, 1
      %p301 = por %p299, %p300
      %p302 = scmp.ne.s32.totalorder %s293, %s294
      %p303 = scmp.eq.s32.totalorder %s31, 0
      %p304 = por %p302, %p303
      %p305 = scmp.ne.s32.totalorder %s293, %s294
      %p306 = scmp.eq.s32.totalorder %s32, 1
      %p307 = por %p305, %p306
      %p309 = scmp.ne.s32.totalorder %s294, %s308
      %p310 = scmp.eq.s32.totalorder %s32, 0
      %p311 = por %p309, %p310
      %s313 = sadd.s32 %s312, 1
      %p316 = scmp.eq.s32.totalorder %s26, 1
      %p317 = scmp.ne.s32.totalorder %s312, %s314
      %p318 = scmp.eq.s32.totalorder %s26, 0
      %p319 = por %p317, %p318
      %p320 = scmp.ne.s32.totalorder %s312, %s314
      %p321 = scmp.eq.s32.totalorder %s31, 1
      %p322 = por %p320, %p321
      %p323 = scmp.ne.s32.totalorder %s314, %s315
      %p324 = scmp.eq.s32.totalorder %s31, 0
      %p325 = por %p323, %p324
      %p326 = scmp.ne.s32.totalorder %s314, %s315
      %p327 = scmp.eq.s32.totalorder %s32, 1
      %p328 = por %p326, %p327
      %p330 = scmp.ne.s32.totalorder %s315, %s329
      %p331 = scmp.eq.s32.totalorder %s32, 0
      %p332 = por %p330, %p331
      %s334 = sadd.s32 %s333, 1
      %p337 = scmp.eq.s32.totalorder %s26, 1
      %p338 = scmp.ne.s32.totalorder %s333, %s335
      %p339 = scmp.eq.s32.totalorder %s26, 0
      %p340 = por %p338, %p339
      %p341 = scmp.ne.s32.totalorder %s333, %s335
      %p342 = scmp.eq.s32.totalorder %s31, 1
      %p343 = por %p341, %p342
      %p344 = scmp.ne.s32.totalorder %s335, %s336
      %p345 = scmp.eq.s32.totalorder %s31, 0
      %p346 = por %p344, %p345
      %p347 = scmp.ne.s32.totalorder %s335, %s336
      %p348 = scmp.eq.s32.totalorder %s32, 1
      %p349 = por %p347, %p348
      %p351 = scmp.ne.s32.totalorder %s336, %s350
      %p352 = scmp.eq.s32.totalorder %s32, 0
      %p353 = por %p351, %p352
      %s355 = sadd.s32 %s354, 1
      %p358 = scmp.eq.s32.totalorder %s26, 1
      %p359 = scmp.ne.s32.totalorder %s354, %s356
      %p360 = scmp.eq.s32.totalorder %s26, 0
      %p361 = por %p359, %p360
      %p362 = scmp.ne.s32.totalorder %s354, %s356
      %p363 = scmp.eq.s32.totalorder %s31, 1
      %p364 = por %p362, %p363
      %p365 = scmp.ne.s32.totalorder %s356, %s357
      %p366 = scmp.eq.s32.totalorder %s31, 0
      %p367 = por %p365, %p366
      %p368 = scmp.ne.s32.totalorder %s356, %s357
      %p369 = scmp.eq.s32.totalorder %s32, 1
      %p370 = por %p368, %p369
      %p372 = scmp.ne.s32.totalorder %s357, %s371
      %p373 = scmp.eq.s32.totalorder %s32, 0
      %p374 = por %p372, %p373
      %s375 = ssub.s32 %s26, %s33
      %p376 = scmp.eq.s32.totalorder %s375, 0
      %s378 = sadd.s32 %s377, 1
      %s379 = scalar_select %p376, %s377, %s378
      %p382 = pneg %p376
      %p383 = scmp.eq.s32.totalorder %s26, 1
      %p384 = por %p382, %p383
      %p385 = scmp.ne.s32.totalorder %s377, %s380
      %p386 = scmp.eq.s32.totalorder %s26, 0
      %p387 = por %p385, %p386
      %p388 = scmp.ne.s32.totalorder %s377, %s380
      %p389 = scmp.eq.s32.totalorder %s31, 1
      %p390 = por %p388, %p389
      %p391 = scmp.ne.s32.totalorder %s380, %s381
      %p392 = scmp.eq.s32.totalorder %s31, 0
      %p393 = por %p391, %p392
      %p394 = scmp.ne.s32.totalorder %s380, %s381
      %p395 = scmp.eq.s32.totalorder %s32, 1
      %p396 = por %p394, %p395
      %p398 = scmp.ne.s32.totalorder %s381, %s397
      %p399 = scmp.eq.s32.totalorder %s32, 0
      %p400 = por %p398, %p399
      %p401 = scmp.le.s32.totalorder 1, %s26
      %p402 = scmp.lt.s32.totalorder %s26, 3
      %p403 = pnand %p401, %p402
      %p404 = pneg %p403
      // Predicated region
      $region9: #{tpu_custom_call.1} parent=5 // pred_check
        _
      $region10: #{tpu_custom_call.1} parent=5 // pred_check_branch
        %406 = sbr.rel (%p403) target = $region12
      $region11: #{tpu_custom_call.1} parent=5 // pred_region
        %s407 = ssub.s32 %s26, 1
        // Predicated region
        $region13: #{tpu_custom_call.1} parent=11 // pred_check
          %p408 = pneg %p73
        $region14: #{tpu_custom_call.1} parent=11 // pred_check_branch
          %410 = sbr.rel (%p408) target = $region16
        $region15: #{tpu_custom_call.1} parent=11 // pred_region
          _
        $region16: #{tpu_custom_call.1} parent=11 // pred_fallthru
          _
        // Predicated region
        $region17: #{tpu_custom_call.1} parent=11 // pred_check
          %p411 = pneg %p94
        $region18: #{tpu_custom_call.1} parent=11 // pred_check_branch
          %413 = sbr.rel (%p411) target = $region20
        $region19: #{tpu_custom_call.1} parent=11 // pred_region
          _
        $region20: #{tpu_custom_call.1} parent=11 // pred_fallthru
          _
        // Predicated region
        $region21: #{tpu_custom_call.1} parent=11 // pred_check
          %p414 = pneg %p115
        $region22: #{tpu_custom_call.1} parent=11 // pred_check_branch
          %416 = sbr.rel (%p414) target = $region24
        $region23: #{tpu_custom_call.1} parent=11 // pred_region
          _
        $region24: #{tpu_custom_call.1} parent=11 // pred_fallthru
          _
        // Predicated region
        $region25: #{tpu_custom_call.1} parent=11 // pred_check
          %p417 = pneg %p136
        $region26: #{tpu_custom_call.1} parent=11 // pred_check_branch
          %419 = sbr.rel (%p417) target = $region28
        $region27: #{tpu_custom_call.1} parent=11 // pred_region
          _
        $region28: #{tpu_custom_call.1} parent=11 // pred_fallthru
          _
        // Predicated region
        $region29: #{tpu_custom_call.1} parent=11 // pred_check
          %p420 = pneg %p157
        $region30: #{tpu_custom_call.1} parent=11 // pred_check_branch
          %422 = sbr.rel (%p420) target = $region32
        $region31: #{tpu_custom_call.1} parent=11 // pred_region
          _
        $region32: #{tpu_custom_call.1} parent=11 // pred_fallthru
          _
        // Predicated region
        $region33: #{tpu_custom_call.1} parent=11 // pred_check
          %p423 = pneg %p178
        $region34: #{tpu_custom_call.1} parent=11 // pred_check_branch
          %425 = sbr.rel (%p423) target = $region36
        $region35: #{tpu_custom_call.1} parent=11 // pred_region
          _
        $region36: #{tpu_custom_call.1} parent=11 // pred_fallthru
          _
        // Predicated region
        $region37: #{tpu_custom_call.1} parent=11 // pred_check
          %p426 = pneg %p199
        $region38: #{tpu_custom_call.1} parent=11 // pred_check_branch
          %428 = sbr.rel (%p426) target = $region40
        $region39: #{tpu_custom_call.1} parent=11 // pred_region
          %s430 = ssub.s32 1024, 1024
          %431 = vsyncadd [#allocation8], %s430
          %s432 = sshll.u32 [#allocation7], 4
          %s433 = int_to_ptr.vmem [resolvable:$true] %s432
          %438 = dma.hbm_to_vmem [thread:$0]  %s7, 1024, %s433, [#allocation8], 64, 64, 4
        $region40: #{tpu_custom_call.1} parent=11 // pred_fallthru
          _
        // Predicated region
        $region41: #{tpu_custom_call.1} parent=11 // pred_check
          %p439 = pneg %p220
        $region42: #{tpu_custom_call.1} parent=11 // pred_check_branch
          %441 = sbr.rel (%p439) target = $region44
        $region43: #{tpu_custom_call.1} parent=11 // pred_region
          _
        $region44: #{tpu_custom_call.1} parent=11 // pred_fallthru
          _
        // Predicated region
        $region45: #{tpu_custom_call.1} parent=11 // pred_check
          %p442 = pneg %p241
        $region46: #{tpu_custom_call.1} parent=11 // pred_check_branch
          %444 = sbr.rel (%p442) target = $region48
        $region47: #{tpu_custom_call.1} parent=11 // pred_region
          _
        $region48: #{tpu_custom_call.1} parent=11 // pred_fallthru
          _
        // Predicated region
        $region49: #{tpu_custom_call.1} parent=11 // pred_check
          %p445 = pneg %p262
        $region50: #{tpu_custom_call.1} parent=11 // pred_check_branch
          %447 = sbr.rel (%p445) target = $region52
        $region51: #{tpu_custom_call.1} parent=11 // pred_region
          _
        $region52: #{tpu_custom_call.1} parent=11 // pred_fallthru
          _
        // Predicated region
        $region53: #{tpu_custom_call.1} parent=11 // pred_check
          %p448 = pneg %p283
        $region54: #{tpu_custom_call.1} parent=11 // pred_check_branch
          %450 = sbr.rel (%p448) target = $region56
        $region55: #{tpu_custom_call.1} parent=11 // pred_region
          _
        $region56: #{tpu_custom_call.1} parent=11 // pred_fallthru
          _
        // Predicated region
        $region57: #{tpu_custom_call.1} parent=11 // pred_check
          %p451 = pneg %p304
        $region58: #{tpu_custom_call.1} parent=11 // pred_check_branch
          %453 = sbr.rel (%p451) target = $region60
        $region59: #{tpu_custom_call.1} parent=11 // pred_region
          _
        $region60: #{tpu_custom_call.1} parent=11 // pred_fallthru
          _
        // Predicated region
        $region61: #{tpu_custom_call.1} parent=11 // pred_check
          %p454 = pneg %p325
        $region62: #{tpu_custom_call.1} parent=11 // pred_check_branch
          %456 = sbr.rel (%p454) target = $region64
        $region63: #{tpu_custom_call.1} parent=11 // pred_region
          _
        $region64: #{tpu_custom_call.1} parent=11 // pred_fallthru
          _
        // Predicated region
        $region65: #{tpu_custom_call.1} parent=11 // pred_check
          %p457 = pneg %p346
        $region66: #{tpu_custom_call.1} parent=11 // pred_check_branch
          %459 = sbr.rel (%p457) target = $region68
        $region67: #{tpu_custom_call.1} parent=11 // pred_region
          _
        $region68: #{tpu_custom_call.1} parent=11 // pred_fallthru
          _
        // Predicated region
        $region69: #{tpu_custom_call.1} parent=11 // pred_check
          %p460 = pneg %p367
        $region70: #{tpu_custom_call.1} parent=11 // pred_check_branch
          %462 = sbr.rel (%p460) target = $region72
        $region71: #{tpu_custom_call.1} parent=11 // pred_region
          _
        $region72: #{tpu_custom_call.1} parent=11 // pred_fallthru
          _
      $region12: #{tpu_custom_call.1} parent=5 // pred_fallthru
        _
      %p463 = scmp.lt.s32.totalorder %s26, 2
      // Predicated region
      $region73: #{tpu_custom_call.1} parent=5 // pred_check
        %p464 = pneg %p463
      $region74: #{tpu_custom_call.1} parent=5 // pred_check_branch
        %466 = sbr.rel (%p464) target = $region76
      $region75: #{tpu_custom_call.1} parent=5 // pred_region
        // Predicated region
        $region77: #{tpu_custom_call.1} parent=75 // pred_check
          %p467 = pneg %p46
        $region78: #{tpu_custom_call.1} parent=75 // pred_check_branch
          %469 = sbr.rel (%p467) target = $region80
        $region79: #{tpu_custom_call.1} parent=75 // pred_region
          %p470 = scmp.lt.s32.totalorder %s26, 1
          %s471 = scalar_select %p470, %s26, 1
          %s472 = smul.addr %s471, 2
          %s473 = smul.addr %s472, 8
          %s474 = scalar_lea.vmem %s0, %s473
        $region80: #{tpu_custom_call.1} parent=75 // pred_fallthru
          _
      $region76: #{tpu_custom_call.1} parent=5 // pred_fallthru
        _
      %p475 = scmp.le.s32.totalorder 1, %s26
      %p476 = scmp.lt.s32.totalorder %s26, 3
      %p477 = pnand %p475, %p476
      %p478 = pneg %p477
      // Predicated region
      $region81: #{tpu_custom_call.1} parent=5 // pred_check
        _
      $region82: #{tpu_custom_call.1} parent=5 // pred_check_branch
        %480 = sbr.rel (%p477) target = $region84
      $region83: #{tpu_custom_call.1} parent=5 // pred_region
        %s481 = ssub.s32 %s26, 1
        // Predicated region
        $region85: #{tpu_custom_call.1} parent=83 // pred_check
          %p482 = pneg %p199
        $region86: #{tpu_custom_call.1} parent=83 // pred_check_branch
          %484 = sbr.rel (%p482) target = $region88
        $region87: #{tpu_custom_call.1} parent=83 // pred_region
          %485 = dma.done [#allocation8], 1024
        $region88: #{tpu_custom_call.1} parent=83 // pred_fallthru
          _
        %p486 = scmp.lt.s32.totalorder %s31, 1
        %s487 = scalar_select %p486, %s31, 1
        %s488 = smul.addr %s487, 2
        %s489 = smul.addr %s488, 8
        %s490 = scalar_lea.vmem %s0, %s489
        %p491 = pneg %p52
        %p492 = pneg %p49
        %p493 = pneg %p73
        %p494 = pneg %p70
        %p495 = pneg %p94
        %p496 = pneg %p91
        %p497 = pneg %p115
        %p498 = pneg %p112
        %p499 = pneg %p136
        %p500 = pneg %p133
        %p501 = pneg %p157
        %p502 = pneg %p154
        %p503 = pneg %p178
        %p504 = pneg %p175
        %p505 = pneg %p199
        %p506 = pneg %p196
        %p507 = pneg %p220
        %p508 = pneg %p217
        %p509 = pneg %p241
        %p510 = pneg %p238
        %p511 = pneg %p262
        %p512 = pneg %p259
        %p513 = pneg %p283
        %p514 = pneg %p280
        %p515 = pneg %p304
        %p516 = pneg %p301
        %p517 = pneg %p325
        %p518 = pneg %p322
        %p519 = pneg %p346
        %p520 = pneg %p343
        %p521 = pneg %p367
        %p522 = pneg %p364
        %p523 = pneg %p393
        %p524 = pneg %p390
        %p525 = scmp.lt.s32.totalorder %s31, 1
        %s526 = scalar_select %p525, %s31, 1
        %s527 = scalar_lea.vmem %s16, %s526
        %p528 = scmp.lt.s32.totalorder %s31, 1
        %s529 = scalar_select %p528, %s31, 1
        %s530 = smul.addr %s529, 2
        %s531 = smul.addr %s530, 8
        %s532 = scalar_lea.vmem %s0, %s531
        %p533 = scmp.lt.s32.totalorder %s31, 1
        %s534 = scalar_select %p533, %s31, 1
        %s535 = scalar_lea.vmem %s16, %s534
        %v537 = vld [vmem:[%s532] sm:$0xff]
        %v538 = vld [vmem:[%s532 + $0x8] sm:$0xff]
        %v539 = vld [vmem:[%s1] sm:$0xf]
        %v540 = vld [vmem:[%s2] sm:$0x1]
        %v542 = vlaneseq
        %v543 = vshrl.u32 %v542, 7
        %v544 = vsub.s32 0, %v543
        %v545 = vrot.slane %v540, %v544
        %vm547 = vcmask 31744
        %v549 = vsel %vm547, %v537, 0
        %v552 = vsel %vm547, %v538, 0
        %vm554 = vcmask 1043456
        %v556 = vsel %vm554, %v539, 0
        %558 = vmatprep.subr.mxu0 0.0
        %559 = vmatpush1.msra.mxu0 %v556
        %560 = vmatprep.subr.mxu0 0.0
        %561 = vmatpush1.msra.mxu0 0.0
        %562 = vmatprep.subr.mxu0 0.0
        %563 = vmatpush1.msra.mxu0 0.0
        %564 = vmatprep.subr.mxu0 0.0
        %565 = vmatpush1.msra.mxu0 0.0
        %566 = vmatprep.subr.mxu0 0.0
        %567 = vmatpush1.msra.mxu0 0.0
        %568 = vmatprep.subr.mxu0 0.0
        %569 = vmatpush1.msra.mxu0 0.0
        %570 = vmatprep.subr.mxu0 0.0
        %571 = vmatpush1.msra.mxu0 0.0
        %572 = vmatprep.subr.mxu0 0.0
        %573 = vmatpush1.msra.mxu0 0.0
        %574 = vmatprep.subr.mxu0 0.0
        %575 = vmatpush1.msra.mxu0 0.0
        %576 = vmatprep.subr.mxu0 0.0
        %577 = vmatpush1.msra.mxu0 0.0
        %578 = vmatprep.subr.mxu0 0.0
        %579 = vmatpush1.msra.mxu0 0.0
        %580 = vmatprep.subr.mxu0 0.0
        %581 = vmatpush1.msra.mxu0 0.0
        %582 = vmatprep.subr.mxu0 0.0
        %583 = vmatpush1.msra.mxu0 0.0
        %584 = vmatprep.subr.mxu0 0.0
        %585 = vmatpush1.msra.mxu0 0.0
        %586 = vmatprep.subr.mxu0 0.0
        %587 = vmatpush1.msra.mxu0 0.0
        %588 = vmatprep.subr.mxu0 0.0
        %589 = vmatpush1.msra.mxu0 0.0
        %590 = vmatprep.subr.mxu0 0.0
        %591 = vmatpush1.msra.mxu0 0.0
        %592 = vmatprep.subr.mxu0 0.0
        %593 = vmatpush1.msra.mxu0 0.0
        %594 = vmatprep.subr.mxu0 0.0
        %595 = vmatpush1.msra.mxu0 0.0
        %596 = vmatprep.subr.mxu0 0.0
        %597 = vmatpush1.msra.mxu0 0.0
        %598 = vmatprep.subr.mxu0 0.0
        %599 = vmatpush1.msra.mxu0 0.0
        %600 = vmatprep.subr.mxu0 0.0
        %601 = vmatpush1.msra.mxu0 0.0
        %602 = vmatprep.subr.mxu0 0.0
        %603 = vmatpush1.msra.mxu0 0.0
        %604 = vmatprep.subr.mxu0 0.0
        %605 = vmatpush1.msra.mxu0 0.0
        %606 = vmatprep.subr.mxu0 0.0
        %607 = vmatpush1.msra.mxu0 0.0
        %608 = vmatprep.subr.mxu0 0.0
        %609 = vmatpush1.msra.mxu0 0.0
        %610 = vmatprep.subr.mxu0 0.0
        %611 = vmatpush1.msra.mxu0 0.0
        %612 = vmatprep.subr.mxu0 0.0
        %613 = vmatpush1.msra.mxu0 0.0
        %614 = vmatprep.subr.mxu0 0.0
        %615 = vmatpush1.msra.mxu0 0.0
        %616 = vmatprep.subr.mxu0 0.0
        %617 = vmatpush1.msra.mxu0 0.0
        %618 = vmatprep.subr.mxu0 0.0
        %619 = vmatpush1.msra.mxu0 0.0
        %620 = vmatprep.subr.mxu0 0.0
        %621 = vmatpush1.msra.mxu0 0.0
        %622 = vmatprep.mubr.f32.mxu0 0.0
        %623 = vmatmul.mubr.f32.gmra.mrb[0].mxu0 %v549
        %v624 = vpop.f32.mrb[0].mxu0
        %v625 = vadd.f32 %v545, %v624
        %v626 = vpop.f32.mrb[0].mxu0
        %627 = vmatprep.mubr.f32.mxu0 0.0
        %628 = vmatmul.mubr.f32.gmra.mrb[0].mxu0 %v552
        %v629 = vpop.f32.mrb[0].mxu0
        %v630 = vadd.f32 %v545, %v629
        %v631 = vpop.f32.mrb[0].mxu0
        %632 = vdwg.mxu0
        %v633 = vmax.f32 %v625, 0.0
        %v634 = vmax.f32 %v630, 0.0
        %v635 = vpack.c.bf16 %v634, %v633
        %v636 = vld [vmem:[%s3] sm:$0xf]
        %v637 = vld [vmem:[%s3 + $0x4] sm:$0xf]
        %v638 = vld [vmem:[%s3 + $0x8] sm:$0xf]
        %v639 = vld [vmem:[%s3 + $0xc] sm:$0xf]
        %v640 = vld [vmem:[%s4] sm:$0x1]
        %v642 = vlaneseq
        %v643 = vshrl.u32 %v642, 7
        %v644 = vsub.s32 0, %v643
        %v645 = vrot.slane %v640, %v644
        %v651 = vunpack.c.l.b16 %v636
        %v652 = vunpack.c.l.b16 %v637
        %v653 = vunpack.c.l.b16 %v638
        %v654 = vunpack.c.l.b16 %v639
        %v655 = vpack.c.b16 %v652, %v651
        %v656 = vpack.c.b16 %v654, %v653
        %vm659 = vcmask 261120
        %v661 = vsel %vm659, %v635, 0
        %663 = vmatprep.subr.bf16.mxu0 0
        %664 = vmatpush1.bf16.msra.mxu0 %v655
        %665 = vmatprep.subr.bf16.mxu0 0
        %666 = vmatpush1.bf16.msra.mxu0 %v656
        %667 = vmatprep.subr.bf16.mxu0 0
        %668 = vmatpush1.bf16.msra.mxu0 0
        %669 = vmatprep.subr.bf16.mxu0 0
        %670 = vmatpush1.bf16.msra.mxu0 0
        %671 = vmatprep.subr.bf16.mxu0 0
        %672 = vmatpush1.bf16.msra.mxu0 0
        %673 = vmatprep.subr.bf16.mxu0 0
        %674 = vmatpush1.bf16.msra.mxu0 0
        %675 = vmatprep.subr.bf16.mxu0 0
        %676 = vmatpush1.bf16.msra.mxu0 0
        %677 = vmatprep.subr.bf16.mxu0 0
        %678 = vmatpush1.bf16.msra.mxu0 0
        %679 = vmatprep.subr.bf16.mxu0 0
        %680 = vmatpush1.bf16.msra.mxu0 0
        %681 = vmatprep.subr.bf16.mxu0 0
        %682 = vmatpush1.bf16.msra.mxu0 0
        %683 = vmatprep.subr.bf16.mxu0 0
        %684 = vmatpush1.bf16.msra.mxu0 0
        %685 = vmatprep.subr.bf16.mxu0 0
        %686 = vmatpush1.bf16.msra.mxu0 0
        %687 = vmatprep.subr.bf16.mxu0 0
        %688 = vmatpush1.bf16.msra.mxu0 0
        %689 = vmatprep.subr.bf16.mxu0 0
        %690 = vmatpush1.bf16.msra.mxu0 0
        %691 = vmatprep.subr.bf16.mxu0 0
        %692 = vmatpush1.bf16.msra.mxu0 0
        %693 = vmatprep.subr.bf16.mxu0 0
        %694 = vmatpush1.bf16.msra.mxu0 0
        %695 = vmatprep.mubr.bf16.mxu0 0
        %696 = vmatmul.mubr.bf16.gmra.mrb[0].mxu0 %v661
        %v697 = vpop.f32.mrb[0].mxu0
        %v698 = vadd.f32 %v645, %v697
        %v699 = vpop.f32.mrb[0].mxu0
        %v700 = vpop.f32.mrb[0].mxu0
        %v701 = vadd.f32 %v645, %v700
        %v702 = vpop.f32.mrb[0].mxu0
        %703 = vdwg.mxu0
        %v704 = vpack.c.bf16 %v701, %v698
        %vm705 = vcmask 523264
        %v706 = vsel %vm705, %v698, -inf
        %v707 = vsel %vm705, %v701, -inf
        %v708 = vmax.f32 %v706, %v707
        %v709 = vrot.slane %v708, 4
        %v710 = vmax.f32 %v708, %v709
        %v711 = vrot.slane %v710, 2
        %v712 = vmax.f32 %v710, %v711
        %v713 = vrot.slane %v712, 1
        %v714 = vmax.f32 %v712, %v713
        %v715 = vpack.c.bf16 %v714, %v714
        %v716 = vld [vmem:[%s5 + $0x40] sm:$0xff]
        %v717 = vld [vmem:[%s5 + $0x48] sm:$0xff]
        %v718 = vld [vmem:[%s5 + $0x50] sm:$0xff]
        %v719 = vld [vmem:[%s5 + $0x58] sm:$0xff]
        %v720 = vld [vmem:[%s5 + $0x60] sm:$0xff]
        %v721 = vld [vmem:[%s5 + $0x68] sm:$0xff]
        %v722 = vld [vmem:[%s5 + $0x70] sm:$0xff]
        %v723 = vld [vmem:[%s5 + $0x78] sm:$0xff]
        %v724 = vld [vmem:[%s6] sm:$0x3]
        %v733 = vunpack.c.l.b16 %v716
        %v734 = vunpack.c.h.b16 %v716
        %v735 = vunpack.c.l.b16 %v717
        %v736 = vunpack.c.h.b16 %v717
        %v737 = vunpack.c.l.b16 %v718
        %v738 = vunpack.c.h.b16 %v718
        %v739 = vunpack.c.l.b16 %v719
        %v740 = vunpack.c.h.b16 %v719
        %v741 = vunpack.c.l.b16 %v720
        %v742 = vunpack.c.h.b16 %v720
        %v743 = vunpack.c.l.b16 %v721
        %v744 = vunpack.c.h.b16 %v721
        %v745 = vunpack.c.l.b16 %v722
        %v746 = vunpack.c.h.b16 %v722
        %v747 = vunpack.c.l.b16 %v723
        %v748 = vunpack.c.h.b16 %v723
        %v749 = vpack.c.b16 %v735, %v733
        %v750 = vpack.c.b16 %v736, %v734
        %v751 = vpack.c.b16 %v739, %v737
        %v752 = vpack.c.b16 %v740, %v738
        %v753 = vpack.c.b16 %v743, %v741
        %v754 = vpack.c.b16 %v744, %v742
        %v755 = vpack.c.b16 %v747, %v745
        %v756 = vpack.c.b16 %v748, %v746
        %v766 = vlaneseq
        %v767 = vshrl.u32 %v766, 7
        %v768 = vsub.s32 0, %v767
        %v769 = vrot.slane %v724, %v768
        %v770 = vlaneseq
        %v771 = vshrl.u32 %v770, 7
        %v772 = vsub.s32 1, %v771
        %v773 = vrot.slane %v724, %v772
        %v777 = vsel %vm705, %v715, 0
        %779 = vmatprep.subr.bf16.mxu0 %v750
        %780 = vmatpush1.bf16.msra.mxu0 %v749
        %781 = vmatprep.subr.bf16.mxu0 %v752
        %782 = vmatpush1.bf16.msra.mxu0 %v751
        %783 = vmatprep.subr.bf16.mxu0 %v754
        %784 = vmatpush1.bf16.msra.mxu0 %v753
        %785 = vmatprep.subr.bf16.mxu0 %v756
        %786 = vmatpush1.bf16.msra.mxu0 %v755
        %787 = vmatprep.subr.bf16.mxu0 0
        %788 = vmatpush1.bf16.msra.mxu0 0
        %789 = vmatprep.subr.bf16.mxu0 0
        %790 = vmatpush1.bf16.msra.mxu0 0
        %791 = vmatprep.subr.bf16.mxu0 0
        %792 = vmatpush1.bf16.msra.mxu0 0
        %793 = vmatprep.subr.bf16.mxu0 0
        %794 = vmatpush1.bf16.msra.mxu0 0
        %795 = vmatprep.subr.bf16.mxu0 0
        %796 = vmatpush1.bf16.msra.mxu0 0
        %797 = vmatprep.subr.bf16.mxu0 0
        %798 = vmatpush1.bf16.msra.mxu0 0
        %799 = vmatprep.subr.bf16.mxu0 0
        %800 = vmatpush1.bf16.msra.mxu0 0
        %801 = vmatprep.subr.bf16.mxu0 0
        %802 = vmatpush1.bf16.msra.mxu0 0
        %803 = vmatprep.subr.bf16.mxu0 0
        %804 = vmatpush1.bf16.msra.mxu0 0
        %805 = vmatprep.subr.bf16.mxu0 0
        %806 = vmatpush1.bf16.msra.mxu0 0
        %807 = vmatprep.subr.bf16.mxu0 0
        %808 = vmatpush1.bf16.msra.mxu0 0
        %809 = vmatprep.subr.bf16.mxu0 0
        %810 = vmatpush1.bf16.msra.mxu0 0
        %811 = vmatprep.mubr.bf16.mxu0 0
        %812 = vmatmul.mubr.bf16.gmra.mrb[0].mxu0 %v777
        %v813 = vpop.f32.mrb[0].mxu0
        %v814 = vadd.f32 %v769, %v813
        %v815 = vpop.f32.mrb[0].mxu0
        %v816 = vadd.f32 %v773, %v815
        %v817 = vpop.f32.mrb[0].mxu0
        %v818 = vpop.f32.mrb[0].mxu0
        %819 = vdwg.mxu0
        %v820 = vld [vmem:[%s5] sm:$0xff]
        %v821 = vld [vmem:[%s5 + $0x8] sm:$0xff]
        %v822 = vld [vmem:[%s5 + $0x10] sm:$0xff]
        %v823 = vld [vmem:[%s5 + $0x18] sm:$0xff]
        %v824 = vld [vmem:[%s5 + $0x20] sm:$0xff]
        %v825 = vld [vmem:[%s5 + $0x28] sm:$0xff]
        %v826 = vld [vmem:[%s5 + $0x30] sm:$0xff]
        %v827 = vld [vmem:[%s5 + $0x38] sm:$0xff]
        %v828 = vlaneseq
        %v829 = vshrl.u32 %v828, 7
        %v830 = vsub.s32 0, %v829
        %v831 = vrot.slane %v814, %v830
        %v832 = vlaneseq
        %v833 = vshrl.u32 %v832, 7
        %v834 = vsub.s32 0, %v833
        %v835 = vrot.slane %v816, %v834
        %v844 = vunpack.c.l.b16 %v820
        %v845 = vunpack.c.h.b16 %v820
        %v846 = vunpack.c.l.b16 %v821
        %v847 = vunpack.c.h.b16 %v821
        %v848 = vunpack.c.l.b16 %v822
        %v849 = vunpack.c.h.b16 %v822
        %v850 = vunpack.c.l.b16 %v823
        %v851 = vunpack.c.h.b16 %v823
        %v852 = vunpack.c.l.b16 %v824
        %v853 = vunpack.c.h.b16 %v824
        %v854 = vunpack.c.l.b16 %v825
        %v855 = vunpack.c.h.b16 %v825
        %v856 = vunpack.c.l.b16 %v826
        %v857 = vunpack.c.h.b16 %v826
        %v858 = vunpack.c.l.b16 %v827
        %v859 = vunpack.c.h.b16 %v827
        %v860 = vpack.c.b16 %v846, %v844
        %v861 = vpack.c.b16 %v847, %v845
        %v862 = vpack.c.b16 %v850, %v848
        %v863 = vpack.c.b16 %v851, %v849
        %v864 = vpack.c.b16 %v854, %v852
        %v865 = vpack.c.b16 %v855, %v853
        %v866 = vpack.c.b16 %v858, %v856
        %v867 = vpack.c.b16 %v859, %v857
        %v877 = vsel %vm705, %v704, 0
        %879 = vmatprep.subr.bf16.mxu0 %v861
        %880 = vmatpush1.bf16.msra.mxu0 %v860
        %881 = vmatprep.subr.bf16.mxu0 %v863
        %882 = vmatpush1.bf16.msra.mxu0 %v862
        %883 = vmatprep.subr.bf16.mxu0 %v865
        %884 = vmatpush1.bf16.msra.mxu0 %v864
        %885 = vmatprep.subr.bf16.mxu0 %v867
        %886 = vmatpush1.bf16.msra.mxu0 %v866
        %887 = vmatprep.subr.bf16.mxu0 0
        %888 = vmatpush1.bf16.msra.mxu0 0
        %889 = vmatprep.subr.bf16.mxu0 0
        %890 = vmatpush1.bf16.msra.mxu0 0
        %891 = vmatprep.subr.bf16.mxu0 0
        %892 = vmatpush1.bf16.msra.mxu0 0
        %893 = vmatprep.subr.bf16.mxu0 0
        %894 = vmatpush1.bf16.msra.mxu0 0
        %895 = vmatprep.subr.bf16.mxu0 0
        %896 = vmatpush1.bf16.msra.mxu0 0
        %897 = vmatprep.subr.bf16.mxu0 0
        %898 = vmatpush1.bf16.msra.mxu0 0
        %899 = vmatprep.subr.bf16.mxu0 0
        %900 = vmatpush1.bf16.msra.mxu0 0
        %901 = vmatprep.subr.bf16.mxu0 0
        %902 = vmatpush1.bf16.msra.mxu0 0
        %903 = vmatprep.subr.bf16.mxu0 0
        %904 = vmatpush1.bf16.msra.mxu0 0
        %905 = vmatprep.subr.bf16.mxu0 0
        %906 = vmatpush1.bf16.msra.mxu0 0
        %907 = vmatprep.subr.bf16.mxu0 0
        %908 = vmatpush1.bf16.msra.mxu0 0
        %909 = vmatprep.subr.bf16.mxu0 0
        %910 = vmatpush1.bf16.msra.mxu0 0
        %911 = vmatprep.mubr.bf16.mxu0 0
        %912 = vmatmul.mubr.bf16.gmra.mrb[0].mxu0 %v877
        %v913 = vpop.f32.mrb[0].mxu0
        %v914 = vadd.f32 %v831, %v913
        %v915 = vpop.f32.mrb[0].mxu0
        %v916 = vadd.f32 %v835, %v915
        %v917 = vpop.f32.mrb[0].mxu0
        %v918 = vadd.f32 %v831, %v917
        %v919 = vpop.f32.mrb[0].mxu0
        %v920 = vadd.f32 %v835, %v919
        %921 = vdwg.mxu0
        %v922 = vmax.f32 %v914, 0.0
        %v923 = vmax.f32 %v916, 0.0
        %v924 = vmax.f32 %v918, 0.0
        %v925 = vmax.f32 %v920, 0.0
        %926 = vxpose.xlu0.b32.start [1/16] %v922, 128
        %927 = vxpose.xlu0.b32.cont [2/16] %v924, 128
        %928 = vxpose.xlu0.b32.cont [3/16] 0.0, 128
        %929 = vxpose.xlu0.b32.cont [4/16] 0.0, 128
        %930 = vxpose.xlu0.b32.cont [5/16] 0.0, 128
        %931 = vxpose.xlu0.b32.cont [6/16] 0.0, 128
        %932 = vxpose.xlu0.b32.cont [7/16] 0.0, 128
        %933 = vxpose.xlu0.b32.cont [8/16] 0.0, 128
        %934 = vxpose.xlu0.b32.cont [9/16] 0.0, 128
        %935 = vxpose.xlu0.b32.cont [10/16] 0.0, 128
        %936 = vxpose.xlu0.b32.cont [11/16] 0.0, 128
        %937 = vxpose.xlu0.b32.cont [12/16] 0.0, 128
        %938 = vxpose.xlu0.b32.cont [13/16] 0.0, 128
        %939 = vxpose.xlu0.b32.cont [14/16] 0.0, 128
        %940 = vxpose.xlu0.b32.cont [15/16] 0.0, 128
        %941 = vxpose.xlu0.b32.end [16/16] 0.0, 128
        %v942 = vpop.trf.xlu0
        %v943 = vpop.trf.xlu0
        %v944 = vpop.trf.xlu0
        %v945 = vpop.trf.xlu0
        %v946 = vpop.trf.xlu0
        %v947 = vpop.trf.xlu0
        %v948 = vpop.trf.xlu0
        %v949 = vpop.trf.xlu0
        %v950 = vpop.trf.xlu0
        %v951 = vpop.trf.xlu0
        %v952 = vpop.trf.xlu0
        %v953 = vpop.trf.xlu0
        %v954 = vpop.trf.xlu0
        %v955 = vpop.trf.xlu0
        %v956 = vpop.trf.xlu0
        %v957 = vpop.trf.xlu0
        %v958 = vpack.c.bf16 %v943, %v942
        %v959 = vpack.c.bf16 %v945, %v944
        %v960 = vpack.c.bf16 %v924, %v922
        %962 = vrot.lane.b32.xlu0 %v960, 96
        %v963 = vpop.permute.xlu0 %962
        %965 = vst.msk [vmem:[#allocation3] sm:$0xff] %vm659, %v963
        %v966 = vpack.c.bf16 %v925, %v923
        %968 = vrot.lane.b32.xlu0 %v960, 64
        %v969 = vpop.permute.xlu0 %968
        %970 = vrot.lane.b32.xlu0 %v966, 64
        %v971 = vpop.permute.xlu0 %970
        %vm972 = vcmask 523264
        %v973 = vsel %vm972, %v969, %v971
        %975 = vst [vmem:[#allocation4] sm:$0xff] %v973
        %976 = vst [vmem:[#allocation2] sm:$0xff] 0.0
        %977 = vst [vmem:[#allocation2 + $0x8] sm:$0xff] 0.0
        %v978 = vld [vmem:[#allocation3] sm:$0xff]
        %v979 = vld [vmem:[#allocation4] sm:$0xff]
        %v981 = vsel %vm659, %v978, 0
        %983 = vmatprep.subr.bf16.mxu0 0
        %984 = vmatpush1.bf16.msra.mxu0 %v958
        %985 = vmatprep.subr.bf16.mxu0 0
        %986 = vmatpush1.bf16.msra.mxu0 %v959
        %987 = vmatprep.subr.bf16.mxu0 0
        %988 = vmatpush1.bf16.msra.mxu0 0
        %989 = vmatprep.subr.bf16.mxu0 0
        %990 = vmatpush1.bf16.msra.mxu0 0
        %991 = vmatprep.subr.bf16.mxu0 0
        %992 = vmatpush1.bf16.msra.mxu0 0
        %993 = vmatprep.subr.bf16.mxu0 0
        %994 = vmatpush1.bf16.msra.mxu0 0
        %995 = vmatprep.subr.bf16.mxu0 0
        %996 = vmatpush1.bf16.msra.mxu0 0
        %997 = vmatprep.subr.bf16.mxu0 0
        %998 = vmatpush1.bf16.msra.mxu0 0
        %999 = vmatprep.subr.bf16.mxu0 0
        %1000 = vmatpush1.bf16.msra.mxu0 0
        %1001 = vmatprep.subr.bf16.mxu0 0
        %1002 = vmatpush1.bf16.msra.mxu0 0
        %1003 = vmatprep.subr.bf16.mxu0 0
        %1004 = vmatpush1.bf16.msra.mxu0 0
        %1005 = vmatprep.subr.bf16.mxu0 0
        %1006 = vmatpush1.bf16.msra.mxu0 0
        %1007 = vmatprep.subr.bf16.mxu0 0
        %1008 = vmatpush1.bf16.msra.mxu0 0
        %1009 = vmatprep.subr.bf16.mxu0 0
        %1010 = vmatpush1.bf16.msra.mxu0 0
        %1011 = vmatprep.subr.bf16.mxu0 0
        %1012 = vmatpush1.bf16.msra.mxu0 0
        %1013 = vmatprep.subr.bf16.mxu0 0
        %1014 = vmatpush1.bf16.msra.mxu0 0
        %1015 = vmatprep.mubr.bf16.mxu0 0
        %1016 = vmatmul.mubr.bf16.gmra.mrb[0].mxu0 %v981
        %v1017 = vpop.f32.mrb[0].mxu0
        %v1018 = vadd.f32 0.0, %v1017
        %v1019 = vpop.f32.mrb[0].mxu0
        %v1020 = vpop.f32.mrb[0].mxu0
        %v1021 = vadd.f32 0.0, %v1020
        %v1022 = vpop.f32.mrb[0].mxu0
        %1023 = vdwg.mxu0
        %vm1024 = vcmask 130048
        %v1025 = vsel %vm1024, %v1018, -inf
        %1026 = vmax.xlane.f32.xlu0 %v1025
        %v1027 = vpop.xlane.xlu0 %1026
        %v1028 = vsel %vm1024, %v1021, -inf
        %1029 = vmax.xlane.f32.xlu0 %v1028
        %v1030 = vpop.xlane.xlu0 %1029
        %v1031 = vsub.f32 %v1018, %v1027
        %v1032 = vsub.f32 %v1021, %v1030
        %v1033 = vmul.f32 %v1031, 1.442695
        %v1034 = vpow.pop %v1033
        %v1035 = vmul.f32 %v1032, 1.442695
        %v1036 = vpow.pop %v1035
        %v1037 = vsel %vm1024, %v1034, 0.0
        %1038 = vadd.xlane.f32.xlu0 %v1037
        %v1039 = vpop.xlane.xlu0 %1038
        %v1040 = vsel %vm1024, %v1036, 0.0
        %1041 = vadd.xlane.f32.xlu0 %v1040
        %v1042 = vpop.xlane.xlu0 %1041
        %v1043 = vrcp.pop %v1039
        %v1044 = vrcp.pop %v1042
        %v1045 = vmul.f32 %v1034, %v1043
        %v1046 = vmul.f32 %v1036, %v1044
        %v1047 = vpack.c.bf16 %v1046, %v1045
        %v1048 = vld [vmem:[#allocation2] sm:$0xff]
        %v1049 = vld [vmem:[#allocation2 + $0x8] sm:$0xff]
        %1050 = vxpose.xlu0.c.b16.start [1/8] %v1047, 128
        %1051 = vxpose.xlu0.c.b16.cont [2/8] 0, 128
        %1052 = vxpose.xlu0.c.b16.cont [3/8] 0, 128
        %1053 = vxpose.xlu0.c.b16.cont [4/8] 0, 128
        %1054 = vxpose.xlu0.c.b16.cont [5/8] 0, 128
        %1055 = vxpose.xlu0.c.b16.cont [6/8] 0, 128
        %1056 = vxpose.xlu0.c.b16.cont [7/8] 0, 128
        %1057 = vxpose.xlu0.c.b16.end [8/8] 0, 128
        %v1058 = vpop.trf.xlu0
        %v1059 = vpop.trf.xlu0
        %v1060 = vpop.trf.xlu0
        %v1061 = vpop.trf.xlu0
        %v1062 = vpop.trf.xlu0
        %v1063 = vpop.trf.xlu0
        %v1064 = vpop.trf.xlu0
        %v1065 = vpop.trf.xlu0
        %v1067 = vsel %vm1024, %v1058, 0
        %1069 = vmatprep.subr.bf16.mxu0 0
        %1070 = vmatpush1.bf16.msra.mxu0 %v979
        %1071 = vmatprep.subr.bf16.mxu0 0
        %1072 = vmatpush1.bf16.msra.mxu0 0
        %1073 = vmatprep.subr.bf16.mxu0 0
        %1074 = vmatpush1.bf16.msra.mxu0 0
        %1075 = vmatprep.subr.bf16.mxu0 0
        %1076 = vmatpush1.bf16.msra.mxu0 0
        %1077 = vmatprep.subr.bf16.mxu0 0
        %1078 = vmatpush1.bf16.msra.mxu0 0
        %1079 = vmatprep.subr.bf16.mxu0 0
        %1080 = vmatpush1.bf16.msra.mxu0 0
        %1081 = vmatprep.subr.bf16.mxu0 0
        %1082 = vmatpush1.bf16.msra.mxu0 0
        %1083 = vmatprep.subr.bf16.mxu0 0
        %1084 = vmatpush1.bf16.msra.mxu0 0
        %1085 = vmatprep.subr.bf16.mxu0 0
        %1086 = vmatpush1.bf16.msra.mxu0 0
        %1087 = vmatprep.subr.bf16.mxu0 0
        %1088 = vmatpush1.bf16.msra.mxu0 0
        %1089 = vmatprep.subr.bf16.mxu0 0
        %1090 = vmatpush1.bf16.msra.mxu0 0
        %1091 = vmatprep.subr.bf16.mxu0 0
        %1092 = vmatpush1.bf16.msra.mxu0 0
        %1093 = vmatprep.subr.bf16.mxu0 0
        %1094 = vmatpush1.bf16.msra.mxu0 0
        %1095 = vmatprep.subr.bf16.mxu0 0
        %1096 = vmatpush1.bf16.msra.mxu0 0
        %1097 = vmatprep.subr.bf16.mxu0 0
        %1098 = vmatpush1.bf16.msra.mxu0 0
        %1099 = vmatprep.subr.bf16.mxu0 0
        %1100 = vmatpush1.bf16.msra.mxu0 0
        %1101 = vmatprep.mubr.bf16.mxu0 0
        %1102 = vmatmul.mubr.bf16.gmra.mrb[0].mxu0 %v1067
        %v1103 = vpop.f32.mrb[0].mxu0
        %v1104 = vadd.f32 0.0, %v1103
        %v1105 = vpop.f32.mrb[0].mxu0
        %v1106 = vpop.f32.mrb[0].mxu0
        %v1107 = vadd.f32 0.0, %v1106
        %v1108 = vpop.f32.mrb[0].mxu0
        %1109 = vdwg.mxu0
        %v1110 = vadd.f32 %v1048, %v1104
        %v1111 = vadd.f32 %v1049, %v1107
        %1112 = vst [vmem:[#allocation2] sm:$0xff] %v1110
        %1113 = vst [vmem:[#allocation2 + $0x8] sm:$0xff] %v1111
        %s1114 = sld [smem:[#allocation6]]
        %v1115 = vld [vmem:[#allocation2] sm:$0xff]
        %v1116 = vld [vmem:[#allocation2 + $0x8] sm:$0xff]
        %v1117 = vstv %s1114
        %v1118 = vmul.f32 %v1117, %v1115
        %v1119 = vmul.f32 %v1117, %v1116
        %v1120 = vpack.c.bf16 %v1119, %v1118
        %v1121 = vld [vmem:[#allocation7 + $0x20] sm:$0xf]
        %v1122 = vld [vmem:[#allocation7 + $0x24] sm:$0xf]
        %v1123 = vld [vmem:[#allocation7 + $0x28] sm:$0xf]
        %v1124 = vld [vmem:[#allocation7 + $0x2c] sm:$0xf]
        %v1125 = vld [vmem:[#allocation7 + $0x30] sm:$0xf]
        %v1126 = vld [vmem:[#allocation7 + $0x34] sm:$0xf]
        %v1127 = vld [vmem:[#allocation7 + $0x38] sm:$0xf]
        %v1128 = vld [vmem:[#allocation7 + $0x3c] sm:$0xf]
        %v1129 = vld [vmem:[%s8] sm:$0x1]
        %v1138 = vunpack.c.l.b16 %v1121
        %v1139 = vunpack.c.l.b16 %v1122
        %v1140 = vunpack.c.l.b16 %v1123
        %v1141 = vunpack.c.l.b16 %v1124
        %v1142 = vunpack.c.l.b16 %v1125
        %v1143 = vunpack.c.l.b16 %v1126
        %v1144 = vunpack.c.l.b16 %v1127
        %v1145 = vunpack.c.l.b16 %v1128
        %v1146 = vpack.c.b16 %v1139, %v1138
        %v1147 = vpack.c.b16 %v1141, %v1140
        %v1148 = vpack.c.b16 %v1143, %v1142
        %v1149 = vpack.c.b16 %v1145, %v1144
        %1154 = vmatprep.subr.bf16.mxu0 0
        %1155 = vmatpush1.bf16.msra.mxu0 %v1146
        %1156 = vmatprep.subr.bf16.mxu0 0
        %1157 = vmatpush1.bf16.msra.mxu0 %v1147
        %1158 = vmatprep.subr.bf16.mxu0 0
        %1159 = vmatpush1.bf16.msra.mxu0 %v1148
        %1160 = vmatprep.subr.bf16.mxu0 0
        %1161 = vmatpush1.bf16.msra.mxu0 %v1149
        %1162 = vmatprep.subr.bf16.mxu0 0
        %1163 = vmatpush1.bf16.msra.mxu0 0
        %1164 = vmatprep.subr.bf16.mxu0 0
        %1165 = vmatpush1.bf16.msra.mxu0 0
        %1166 = vmatprep.subr.bf16.mxu0 0
        %1167 = vmatpush1.bf16.msra.mxu0 0
        %1168 = vmatprep.subr.bf16.mxu0 0
        %1169 = vmatpush1.bf16.msra.mxu0 0
        %1170 = vmatprep.subr.bf16.mxu0 0
        %1171 = vmatpush1.bf16.msra.mxu0 0
        %1172 = vmatprep.subr.bf16.mxu0 0
        %1173 = vmatpush1.bf16.msra.mxu0 0
        %1174 = vmatprep.subr.bf16.mxu0 0
        %1175 = vmatpush1.bf16.msra.mxu0 0
        %1176 = vmatprep.subr.bf16.mxu0 0
        %1177 = vmatpush1.bf16.msra.mxu0 0
        %1178 = vmatprep.subr.bf16.mxu0 0
        %1179 = vmatpush1.bf16.msra.mxu0 0
        %1180 = vmatprep.subr.bf16.mxu0 0
        %1181 = vmatpush1.bf16.msra.mxu0 0
        %1182 = vmatprep.subr.bf16.mxu0 0
        %1183 = vmatpush1.bf16.msra.mxu0 0
        %1184 = vmatprep.subr.bf16.mxu0 0
        %1185 = vmatpush1.bf16.msra.mxu0 0
        %1186 = vmatprep.mubr.bf16.mxu0 0
        %1187 = vmatmul.mubr.bf16.gmra.mrb[0].mxu0 %v777
        %v1188 = vpop.f32.mrb[0].mxu0
        %v1189 = vadd.f32 %v1129, %v1188
        %v1190 = vpop.f32.mrb[0].mxu0
        %v1191 = vpop.f32.mrb[0].mxu0
        %v1192 = vpop.f32.mrb[0].mxu0
        %1193 = vdwg.mxu0
        %v1194 = vld [vmem:[#allocation7] sm:$0xf]
        %v1195 = vld [vmem:[#allocation7 + $0x4] sm:$0xf]
        %v1196 = vld [vmem:[#allocation7 + $0x8] sm:$0xf]
        %v1197 = vld [vmem:[#allocation7 + $0xc] sm:$0xf]
        %v1198 = vld [vmem:[#allocation7 + $0x10] sm:$0xf]
        %v1199 = vld [vmem:[#allocation7 + $0x14] sm:$0xf]
        %v1200 = vld [vmem:[#allocation7 + $0x18] sm:$0xf]
        %v1201 = vld [vmem:[#allocation7 + $0x1c] sm:$0xf]
        %v1202 = vld [vmem:[#allocation7] sm:$0xf]
        %v1203 = vld [vmem:[#allocation7 + $0x4] sm:$0xf]
        %v1204 = vld [vmem:[#allocation7 + $0x8] sm:$0xf]
        %v1205 = vld [vmem:[#allocation7 + $0xc] sm:$0xf]
        %v1206 = vld [vmem:[#allocation7 + $0x10] sm:$0xf]
        %v1207 = vld [vmem:[#allocation7 + $0x14] sm:$0xf]
        %v1208 = vld [vmem:[#allocation7 + $0x18] sm:$0xf]
        %v1209 = vld [vmem:[#allocation7 + $0x1c] sm:$0xf]
        %v1218 = vunpack.c.l.b16 %v1202
        %v1219 = vunpack.c.l.b16 %v1203
        %v1220 = vunpack.c.l.b16 %v1204
        %v1221 = vunpack.c.l.b16 %v1205
        %v1222 = vunpack.c.l.b16 %v1206
        %v1223 = vunpack.c.l.b16 %v1207
        %v1224 = vunpack.c.l.b16 %v1208
        %v1225 = vunpack.c.l.b16 %v1209
        %v1226 = vpack.c.b16 %v1219, %v1218
        %v1227 = vpack.c.b16 %v1221, %v1220
        %v1228 = vpack.c.b16 %v1223, %v1222
        %v1229 = vpack.c.b16 %v1225, %v1224
        %1234 = vmatprep.subr.bf16.mxu0 0
        %1235 = vmatpush1.bf16.msra.mxu0 %v1226
        %1236 = vmatprep.subr.bf16.mxu0 0
        %1237 = vmatpush1.bf16.msra.mxu0 %v1227
        %1238 = vmatprep.subr.bf16.mxu0 0
        %1239 = vmatpush1.bf16.msra.mxu0 %v1228
        %1240 = vmatprep.subr.bf16.mxu0 0
        %1241 = vmatpush1.bf16.msra.mxu0 %v1229
        %1242 = vmatprep.subr.bf16.mxu0 0
        %1243 = vmatpush1.bf16.msra.mxu0 0
        %1244 = vmatprep.subr.bf16.mxu0 0
        %1245 = vmatpush1.bf16.msra.mxu0 0
        %1246 = vmatprep.subr.bf16.mxu0 0
        %1247 = vmatpush1.bf16.msra.mxu0 0
        %1248 = vmatprep.subr.bf16.mxu0 0
        %1249 = vmatpush1.bf16.msra.mxu0 0
        %1250 = vmatprep.subr.bf16.mxu0 0
        %1251 = vmatpush1.bf16.msra.mxu0 0
        %1252 = vmatprep.subr.bf16.mxu0 0
        %1253 = vmatpush1.bf16.msra.mxu0 0
        %1254 = vmatprep.subr.bf16.mxu0 0
        %1255 = vmatpush1.bf16.msra.mxu0 0
        %1256 = vmatprep.subr.bf16.mxu0 0
        %1257 = vmatpush1.bf16.msra.mxu0 0
        %1258 = vmatprep.subr.bf16.mxu0 0
        %1259 = vmatpush1.bf16.msra.mxu0 0
        %1260 = vmatprep.subr.bf16.mxu0 0
        %1261 = vmatpush1.bf16.msra.mxu0 0
        %1262 = vmatprep.subr.bf16.mxu0 0
        %1263 = vmatpush1.bf16.msra.mxu0 0
        %1264 = vmatprep.subr.bf16.mxu0 0
        %1265 = vmatpush1.bf16.msra.mxu0 0
        %1266 = vmatprep.mubr.bf16.mxu0 0
        %1267 = vmatmul.mubr.bf16.gmra.mrb[0].mxu0 %v877
        %v1268 = vpop.f32.mrb[0].mxu0
        %v1269 = vadd.f32 0.0, %v1268
        %v1270 = vpop.f32.mrb[0].mxu0
        %v1271 = vpop.f32.mrb[0].mxu0
        %v1272 = vadd.f32 0.0, %v1271
        %v1273 = vpop.f32.mrb[0].mxu0
        %1274 = vdwg.mxu0
        %v1283 = vunpack.c.l.b16 %v1194
        %v1284 = vunpack.c.l.b16 %v1195
        %v1285 = vunpack.c.l.b16 %v1196
        %v1286 = vunpack.c.l.b16 %v1197
        %v1287 = vunpack.c.l.b16 %v1198
        %v1288 = vunpack.c.l.b16 %v1199
        %v1289 = vunpack.c.l.b16 %v1200
        %v1290 = vunpack.c.l.b16 %v1201
        %v1291 = vpack.c.b16 %v1284, %v1283
        %v1292 = vpack.c.b16 %v1286, %v1285
        %v1293 = vpack.c.b16 %v1288, %v1287
        %v1294 = vpack.c.b16 %v1290, %v1289
        %1299 = vmatprep.subr.bf16.mxu0 0
        %1300 = vmatpush1.bf16.msra.mxu0 %v1291
        %1301 = vmatprep.subr.bf16.mxu0 0
        %1302 = vmatpush1.bf16.msra.mxu0 %v1292
        %1303 = vmatprep.subr.bf16.mxu0 0
        %1304 = vmatpush1.bf16.msra.mxu0 %v1293
        %1305 = vmatprep.subr.bf16.mxu0 0
        %1306 = vmatpush1.bf16.msra.mxu0 %v1294
        %1307 = vmatprep.subr.bf16.mxu0 0
        %1308 = vmatpush1.bf16.msra.mxu0 %v1146
        %1309 = vmatprep.subr.bf16.mxu0 0
        %1310 = vmatpush1.bf16.msra.mxu0 %v1147
        %1311 = vmatprep.subr.bf16.mxu0 0
        %1312 = vmatpush1.bf16.msra.mxu0 %v1148
        %1313 = vmatprep.subr.bf16.mxu0 0
        %1314 = vmatpush1.bf16.msra.mxu0 %v1149
        %1315 = vmatprep.subr.bf16.mxu0 0
        %1316 = vmatpush1.bf16.msra.mxu0 0
        %1317 = vmatprep.subr.bf16.mxu0 0
        %1318 = vmatpush1.bf16.msra.mxu0 0
        %1319 = vmatprep.subr.bf16.mxu0 0
        %1320 = vmatpush1.bf16.msra.mxu0 0
        %1321 = vmatprep.subr.bf16.mxu0 0
        %1322 = vmatpush1.bf16.msra.mxu0 0
        %1323 = vmatprep.subr.bf16.mxu0 0
        %1324 = vmatpush1.bf16.msra.mxu0 0
        %1325 = vmatprep.subr.bf16.mxu0 0
        %1326 = vmatpush1.bf16.msra.mxu0 0
        %1327 = vmatprep.subr.bf16.mxu0 0
        %1328 = vmatpush1.bf16.msra.mxu0 0
        %1329 = vmatprep.subr.bf16.mxu0 0
        %1330 = vmatpush1.bf16.msra.mxu0 0
        %1331 = vmatprep.mubr.bf16.mxu0 0
        %1332 = vmatmul.mubr.bf16.gmra.mrb[0].mxu0 %v1120
        %v1333 = vpop.f32.mrb[0].mxu0
        %v1334 = vadd.f32 %v1269, %v1333
        %v1335 = vpop.f32.mrb[0].mxu0
        %v1336 = vpop.f32.mrb[0].mxu0
        %v1337 = vadd.f32 %v1272, %v1336
        %v1338 = vpop.f32.mrb[0].mxu0
        %1339 = vdwg.mxu0
        %v1340 = vlaneseq
        %v1341 = vshrl.u32 %v1340, 7
        %v1342 = vsub.s32 0, %v1341
        %v1343 = vrot.slane %v1189, %v1342
        %v1344 = vadd.f32 %v1334, %v1343
        %v1345 = vadd.f32 %v1337, %v1343
        %v1346 = vmax.f32 %v1344, 0.0
        %v1347 = vmax.f32 %v1345, 0.0
        %v1348 = vpack.c.bf16 %v1347, %v1346
        %v1349 = vld [vmem:[%s9] sm:$0xff]
        %v1350 = vld [vmem:[%s9 + $0x8] sm:$0xff]
        %v1351 = vld [vmem:[%s9 + $0x10] sm:$0xff]
        %v1352 = vld [vmem:[%s9 + $0x18] sm:$0xff]
        %v1353 = vld [vmem:[%s9 + $0x20] sm:$0xff]
        %v1354 = vld [vmem:[%s9 + $0x28] sm:$0xff]
        %v1355 = vld [vmem:[%s9 + $0x30] sm:$0xff]
        %v1356 = vld [vmem:[%s9 + $0x38] sm:$0xff]
        %v1357 = vld [vmem:[%s9 + $0x40] sm:$0xff]
        %v1358 = vld [vmem:[%s9 + $0x48] sm:$0xff]
        %v1359 = vld [vmem:[%s9 + $0x50] sm:$0xff]
        %v1360 = vld [vmem:[%s9 + $0x58] sm:$0xff]
        %v1361 = vld [vmem:[%s9 + $0x60] sm:$0xff]
        %v1362 = vld [vmem:[%s9 + $0x68] sm:$0xff]
        %v1363 = vld [vmem:[%s9 + $0x70] sm:$0xff]
        %v1364 = vld [vmem:[%s9 + $0x78] sm:$0xff]
        %v1365 = vld [vmem:[%s10] sm:$0x3]
        %v1367 = vlaneseq
        %v1368 = vshrl.u32 %v1367, 7
        %v1369 = vsub.s32 0, %v1368
        %v1370 = vrot.slane %v1365, %v1369
        %v1371 = vlaneseq
        %v1372 = vshrl.u32 %v1371, 7
        %v1373 = vsub.s32 1, %v1372
        %v1374 = vrot.slane %v1365, %v1373
        %v1393 = vunpack.c.l.b16 %v1349
        %v1394 = vunpack.c.h.b16 %v1349
        %v1395 = vunpack.c.l.b16 %v1350
        %v1396 = vunpack.c.h.b16 %v1350
        %v1397 = vunpack.c.l.b16 %v1351
        %v1398 = vunpack.c.h.b16 %v1351
        %v1399 = vunpack.c.l.b16 %v1352
        %v1400 = vunpack.c.h.b16 %v1352
        %v1401 = vunpack.c.l.b16 %v1353
        %v1402 = vunpack.c.h.b16 %v1353
        %v1403 = vunpack.c.l.b16 %v1354
        %v1404 = vunpack.c.h.b16 %v1354
        %v1405 = vunpack.c.l.b16 %v1355
        %v1406 = vunpack.c.h.b16 %v1355
        %v1407 = vunpack.c.l.b16 %v1356
        %v1408 = vunpack.c.h.b16 %v1356
        %v1409 = vunpack.c.l.b16 %v1357
        %v1410 = vunpack.c.h.b16 %v1357
        %v1411 = vunpack.c.l.b16 %v1358
        %v1412 = vunpack.c.h.b16 %v1358
        %v1413 = vunpack.c.l.b16 %v1359
        %v1414 = vunpack.c.h.b16 %v1359
        %v1415 = vunpack.c.l.b16 %v1360
        %v1416 = vunpack.c.h.b16 %v1360
        %v1417 = vunpack.c.l.b16 %v1361
        %v1418 = vunpack.c.h.b16 %v1361
        %v1419 = vunpack.c.l.b16 %v1362
        %v1420 = vunpack.c.h.b16 %v1362
        %v1421 = vunpack.c.l.b16 %v1363
        %v1422 = vunpack.c.h.b16 %v1363
        %v1423 = vunpack.c.l.b16 %v1364
        %v1424 = vunpack.c.h.b16 %v1364
        %v1425 = vpack.c.b16 %v1395, %v1393
        %v1426 = vpack.c.b16 %v1396, %v1394
        %v1427 = vpack.c.b16 %v1399, %v1397
        %v1428 = vpack.c.b16 %v1400, %v1398
        %v1429 = vpack.c.b16 %v1403, %v1401
        %v1430 = vpack.c.b16 %v1404, %v1402
        %v1431 = vpack.c.b16 %v1407, %v1405
        %v1432 = vpack.c.b16 %v1408, %v1406
        %v1433 = vpack.c.b16 %v1411, %v1409
        %v1434 = vpack.c.b16 %v1412, %v1410
        %v1435 = vpack.c.b16 %v1415, %v1413
        %v1436 = vpack.c.b16 %v1416, %v1414
        %v1437 = vpack.c.b16 %v1419, %v1417
        %v1438 = vpack.c.b16 %v1420, %v1418
        %v1439 = vpack.c.b16 %v1423, %v1421
        %v1440 = vpack.c.b16 %v1424, %v1422
        %1457 = vmatprep.subr.bf16.mxu0 %v1426
        %1458 = vmatpush1.bf16.msra.mxu0 %v1425
        %1459 = vmatprep.subr.bf16.mxu0 %v1428
        %1460 = vmatpush1.bf16.msra.mxu0 %v1427
        %1461 = vmatprep.subr.bf16.mxu0 %v1430
        %1462 = vmatpush1.bf16.msra.mxu0 %v1429
        %1463 = vmatprep.subr.bf16.mxu0 %v1432
        %1464 = vmatpush1.bf16.msra.mxu0 %v1431
        %1465 = vmatprep.subr.bf16.mxu0 %v1434
        %1466 = vmatpush1.bf16.msra.mxu0 %v1433
        %1467 = vmatprep.subr.bf16.mxu0 %v1436
        %1468 = vmatpush1.bf16.msra.mxu0 %v1435
        %1469 = vmatprep.subr.bf16.mxu0 %v1438
        %1470 = vmatpush1.bf16.msra.mxu0 %v1437
        %1471 = vmatprep.subr.bf16.mxu0 %v1440
        %1472 = vmatpush1.bf16.msra.mxu0 %v1439
        %1473 = vmatprep.subr.bf16.mxu0 0
        %1474 = vmatpush1.bf16.msra.mxu0 0
        %1475 = vmatprep.subr.bf16.mxu0 0
        %1476 = vmatpush1.bf16.msra.mxu0 0
        %1477 = vmatprep.subr.bf16.mxu0 0
        %1478 = vmatpush1.bf16.msra.mxu0 0
        %1479 = vmatprep.subr.bf16.mxu0 0
        %1480 = vmatpush1.bf16.msra.mxu0 0
        %1481 = vmatprep.subr.bf16.mxu0 0
        %1482 = vmatpush1.bf16.msra.mxu0 0
        %1483 = vmatprep.subr.bf16.mxu0 0
        %1484 = vmatpush1.bf16.msra.mxu0 0
        %1485 = vmatprep.subr.bf16.mxu0 0
        %1486 = vmatpush1.bf16.msra.mxu0 0
        %1487 = vmatprep.subr.bf16.mxu0 0
        %1488 = vmatpush1.bf16.msra.mxu0 0
        %1489 = vmatprep.mubr.bf16.mxu0 0
        %1490 = vmatmul.mubr.bf16.gmra.mrb[0].mxu0 %v1348
        %v1491 = vpop.f32.mrb[0].mxu0
        %v1492 = vadd.f32 %v1370, %v1491
        %v1493 = vpop.f32.mrb[0].mxu0
        %v1494 = vadd.f32 %v1374, %v1493
        %v1495 = vpop.f32.mrb[0].mxu0
        %v1496 = vadd.f32 %v1370, %v1495
        %v1497 = vpop.f32.mrb[0].mxu0
        %v1498 = vadd.f32 %v1374, %v1497
        %1499 = vdwg.mxu0
        %v1500 = vmax.f32 %v1492, %v1496
        %v1501 = vrot.slane %v1500, 4
        %v1502 = vmax.f32 %v1500, %v1501
        %v1503 = vrot.slane %v1502, 2
        %v1504 = vmax.f32 %v1502, %v1503
        %v1505 = vrot.slane %v1504, 1
        %v1506 = vmax.f32 %v1504, %v1505
        %v1507 = vmax.f32 %v1494, %v1498
        %v1508 = vrot.slane %v1507, 4
        %v1509 = vmax.f32 %v1507, %v1508
        %v1510 = vrot.slane %v1509, 2
        %v1511 = vmax.f32 %v1509, %v1510
        %v1512 = vrot.slane %v1511, 1
        %v1513 = vmax.f32 %v1511, %v1512
        %v1514 = vpack.c.bf16 %v1506, %v1506
        %v1515 = vpack.c.bf16 %v1513, %v1513
        %v1516 = vld [vmem:[%s11] sm:$0xff]
        %v1517 = vld [vmem:[%s11 + $0x8] sm:$0xff]
        %v1518 = vld [vmem:[%s11 + $0x10] sm:$0xff]
        %v1519 = vld [vmem:[%s11 + $0x18] sm:$0xff]
        %v1520 = vld [vmem:[%s11 + $0x20] sm:$0xff]
        %v1521 = vld [vmem:[%s11 + $0x28] sm:$0xff]
        %v1522 = vld [vmem:[%s11 + $0x30] sm:$0xff]
        %v1523 = vld [vmem:[%s11 + $0x38] sm:$0xff]
        %v1524 = vld [vmem:[%s11 + $0x40] sm:$0xff]
        %v1525 = vld [vmem:[%s11 + $0x48] sm:$0xff]
        %v1526 = vld [vmem:[%s11 + $0x50] sm:$0xff]
        %v1527 = vld [vmem:[%s11 + $0x58] sm:$0xff]
        %v1528 = vld [vmem:[%s11 + $0x60] sm:$0xff]
        %v1529 = vld [vmem:[%s11 + $0x68] sm:$0xff]
        %v1530 = vld [vmem:[%s11 + $0x70] sm:$0xff]
        %v1531 = vld [vmem:[%s11 + $0x78] sm:$0xff]
        %v1532 = vld [vmem:[%s11 + $0x80] sm:$0xff]
        %v1533 = vld [vmem:[%s11 + $0x88] sm:$0xff]
        %v1534 = vld [vmem:[%s11 + $0x90] sm:$0xff]
        %v1535 = vld [vmem:[%s11 + $0x98] sm:$0xff]
        %v1536 = vld [vmem:[%s11 + $0xa0] sm:$0xff]
        %v1537 = vld [vmem:[%s11 + $0xa8] sm:$0xff]
        %v1538 = vld [vmem:[%s11 + $0xb0] sm:$0xff]
        %v1539 = vld [vmem:[%s11 + $0xb8] sm:$0xff]
        %v1540 = vld [vmem:[%s11 + $0xc0] sm:$0xff]
        %v1541 = vld [vmem:[%s11 + $0xc8] sm:$0xff]
        %v1542 = vld [vmem:[%s11 + $0xd0] sm:$0xff]
        %v1543 = vld [vmem:[%s11 + $0xd8] sm:$0xff]
        %v1544 = vld [vmem:[%s11 + $0xe0] sm:$0xff]
        %v1545 = vld [vmem:[%s11 + $0xe8] sm:$0xff]
        %v1546 = vld [vmem:[%s11 + $0xf0] sm:$0xff]
        %v1547 = vld [vmem:[%s11 + $0xf8] sm:$0xff]
        %v1548 = vld [vmem:[%s12] sm:$0x3]
        %v1581 = vunpack.c.l.b16 %v1516
        %v1582 = vunpack.c.h.b16 %v1516
        %v1583 = vunpack.c.l.b16 %v1517
        %v1584 = vunpack.c.h.b16 %v1517
        %v1585 = vunpack.c.l.b16 %v1518
        %v1586 = vunpack.c.h.b16 %v1518
        %v1587 = vunpack.c.l.b16 %v1519
        %v1588 = vunpack.c.h.b16 %v1519
        %v1589 = vunpack.c.l.b16 %v1520
        %v1590 = vunpack.c.h.b16 %v1520
        %v1591 = vunpack.c.l.b16 %v1521
        %v1592 = vunpack.c.h.b16 %v1521
        %v1593 = vunpack.c.l.b16 %v1522
        %v1594 = vunpack.c.h.b16 %v1522
        %v1595 = vunpack.c.l.b16 %v1523
        %v1596 = vunpack.c.h.b16 %v1523
        %v1597 = vunpack.c.l.b16 %v1524
        %v1598 = vunpack.c.h.b16 %v1524
        %v1599 = vunpack.c.l.b16 %v1525
        %v1600 = vunpack.c.h.b16 %v1525
        %v1601 = vunpack.c.l.b16 %v1526
        %v1602 = vunpack.c.h.b16 %v1526
        %v1603 = vunpack.c.l.b16 %v1527
        %v1604 = vunpack.c.h.b16 %v1527
        %v1605 = vunpack.c.l.b16 %v1528
        %v1606 = vunpack.c.h.b16 %v1528
        %v1607 = vunpack.c.l.b16 %v1529
        %v1608 = vunpack.c.h.b16 %v1529
        %v1609 = vunpack.c.l.b16 %v1530
        %v1610 = vunpack.c.h.b16 %v1530
        %v1611 = vunpack.c.l.b16 %v1531
        %v1612 = vunpack.c.h.b16 %v1531
        %v1613 = vunpack.c.l.b16 %v1532
        %v1614 = vunpack.c.h.b16 %v1532
        %v1615 = vunpack.c.l.b16 %v1533
        %v1616 = vunpack.c.h.b16 %v1533
        %v1617 = vunpack.c.l.b16 %v1534
        %v1618 = vunpack.c.h.b16 %v1534
        %v1619 = vunpack.c.l.b16 %v1535
        %v1620 = vunpack.c.h.b16 %v1535
        %v1621 = vunpack.c.l.b16 %v1536
        %v1622 = vunpack.c.h.b16 %v1536
        %v1623 = vunpack.c.l.b16 %v1537
        %v1624 = vunpack.c.h.b16 %v1537
        %v1625 = vunpack.c.l.b16 %v1538
        %v1626 = vunpack.c.h.b16 %v1538
        %v1627 = vunpack.c.l.b16 %v1539
        %v1628 = vunpack.c.h.b16 %v1539
        %v1629 = vunpack.c.l.b16 %v1540
        %v1630 = vunpack.c.h.b16 %v1540
        %v1631 = vunpack.c.l.b16 %v1541
        %v1632 = vunpack.c.h.b16 %v1541
        %v1633 = vunpack.c.l.b16 %v1542
        %v1634 = vunpack.c.h.b16 %v1542
        %v1635 = vunpack.c.l.b16 %v1543
        %v1636 = vunpack.c.h.b16 %v1543
        %v1637 = vunpack.c.l.b16 %v1544
        %v1638 = vunpack.c.h.b16 %v1544
        %v1639 = vunpack.c.l.b16 %v1545
        %v1640 = vunpack.c.h.b16 %v1545
        %v1641 = vunpack.c.l.b16 %v1546
        %v1642 = vunpack.c.h.b16 %v1546
        %v1643 = vunpack.c.l.b16 %v1547
        %v1644 = vunpack.c.h.b16 %v1547
        %v1645 = vpack.c.b16 %v1583, %v1581
        %v1646 = vpack.c.b16 %v1584, %v1582
        %v1647 = vpack.c.b16 %v1587, %v1585
        %v1648 = vpack.c.b16 %v1588, %v1586
        %v1649 = vpack.c.b16 %v1591, %v1589
        %v1650 = vpack.c.b16 %v1592, %v1590
        %v1651 = vpack.c.b16 %v1595, %v1593
        %v1652 = vpack.c.b16 %v1596, %v1594
        %v1653 = vpack.c.b16 %v1599, %v1597
        %v1654 = vpack.c.b16 %v1600, %v1598
        %v1655 = vpack.c.b16 %v1603, %v1601
        %v1656 = vpack.c.b16 %v1604, %v1602
        %v1657 = vpack.c.b16 %v1607, %v1605
        %v1658 = vpack.c.b16 %v1608, %v1606
        %v1659 = vpack.c.b16 %v1611, %v1609
        %v1660 = vpack.c.b16 %v1612, %v1610
        %v1661 = vpack.c.b16 %v1615, %v1613
        %v1662 = vpack.c.b16 %v1616, %v1614
        %v1663 = vpack.c.b16 %v1619, %v1617
        %v1664 = vpack.c.b16 %v1620, %v1618
        %v1665 = vpack.c.b16 %v1623, %v1621
        %v1666 = vpack.c.b16 %v1624, %v1622
        %v1667 = vpack.c.b16 %v1627, %v1625
        %v1668 = vpack.c.b16 %v1628, %v1626
        %v1669 = vpack.c.b16 %v1631, %v1629
        %v1670 = vpack.c.b16 %v1632, %v1630
        %v1671 = vpack.c.b16 %v1635, %v1633
        %v1672 = vpack.c.b16 %v1636, %v1634
        %v1673 = vpack.c.b16 %v1639, %v1637
        %v1674 = vpack.c.b16 %v1640, %v1638
        %v1675 = vpack.c.b16 %v1643, %v1641
        %v1676 = vpack.c.b16 %v1644, %v1642
        %v1710 = vlaneseq
        %v1711 = vshrl.u32 %v1710, 7
        %v1712 = vsub.s32 0, %v1711
        %v1713 = vrot.slane %v1548, %v1712
        %v1714 = vlaneseq
        %v1715 = vshrl.u32 %v1714, 7
        %v1716 = vsub.s32 1, %v1715
        %v1717 = vrot.slane %v1548, %v1716
        %1720 = vmatprep.subr.bf16.mxu0 %v1646
        %1721 = vmatpush1.bf16.msra.mxu0 %v1645
        %1722 = vmatprep.subr.bf16.mxu0 %v1648
        %1723 = vmatpush1.bf16.msra.mxu0 %v1647
        %1724 = vmatprep.subr.bf16.mxu0 %v1650
        %1725 = vmatpush1.bf16.msra.mxu0 %v1649
        %1726 = vmatprep.subr.bf16.mxu0 %v1652
        %1727 = vmatpush1.bf16.msra.mxu0 %v1651
        %1728 = vmatprep.subr.bf16.mxu0 %v1654
        %1729 = vmatpush1.bf16.msra.mxu0 %v1653
        %1730 = vmatprep.subr.bf16.mxu0 %v1656
        %1731 = vmatpush1.bf16.msra.mxu0 %v1655
        %1732 = vmatprep.subr.bf16.mxu0 %v1658
        %1733 = vmatpush1.bf16.msra.mxu0 %v1657
        %1734 = vmatprep.subr.bf16.mxu0 %v1660
        %1735 = vmatpush1.bf16.msra.mxu0 %v1659
        %1736 = vmatprep.subr.bf16.mxu0 %v1662
        %1737 = vmatpush1.bf16.msra.mxu0 %v1661
        %1738 = vmatprep.subr.bf16.mxu0 %v1664
        %1739 = vmatpush1.bf16.msra.mxu0 %v1663
        %1740 = vmatprep.subr.bf16.mxu0 %v1666
        %1741 = vmatpush1.bf16.msra.mxu0 %v1665
        %1742 = vmatprep.subr.bf16.mxu0 %v1668
        %1743 = vmatpush1.bf16.msra.mxu0 %v1667
        %1744 = vmatprep.subr.bf16.mxu0 %v1670
        %1745 = vmatpush1.bf16.msra.mxu0 %v1669
        %1746 = vmatprep.subr.bf16.mxu0 %v1672
        %1747 = vmatpush1.bf16.msra.mxu0 %v1671
        %1748 = vmatprep.subr.bf16.mxu0 %v1674
        %1749 = vmatpush1.bf16.msra.mxu0 %v1673
        %1750 = vmatprep.subr.bf16.mxu0 %v1676
        %1751 = vmatpush1.bf16.msra.mxu0 %v1675
        %1752 = vmatprep.mubr.bf16.mxu0 %v1515
        %1753 = vmatmul.mubr.bf16.gmra.mrb[0].mxu0 %v1514
        %v1754 = vpop.f32.mrb[0].mxu0
        %v1755 = vadd.f32 %v1713, %v1754
        %v1756 = vpop.f32.mrb[0].mxu0
        %v1757 = vadd.f32 %v1717, %v1756
        %v1758 = vpop.f32.mrb[0].mxu0
        %v1759 = vpop.f32.mrb[0].mxu0
        %1760 = vdwg.mxu0
        %v1761 = vmax.f32 %v1755, 0.0
        %v1762 = vmax.f32 %v1757, 0.0
        %v1763 = vpack.c.bf16 %v1761, %v1761
        %v1764 = vpack.c.bf16 %v1762, %v1762
        %v1765 = vld [vmem:[%s13] sm:$0xf]
        %v1766 = vld [vmem:[%s13 + $0x4] sm:$0xf]
        %v1767 = vld [vmem:[%s13 + $0x8] sm:$0xf]
        %v1768 = vld [vmem:[%s13 + $0xc] sm:$0xf]
        %v1769 = vld [vmem:[%s13 + $0x10] sm:$0xf]
        %v1770 = vld [vmem:[%s13 + $0x14] sm:$0xf]
        %v1771 = vld [vmem:[%s13 + $0x18] sm:$0xf]
        %v1772 = vld [vmem:[%s13 + $0x1c] sm:$0xf]
        %v1773 = vld [vmem:[%s13 + $0x20] sm:$0xf]
        %v1774 = vld [vmem:[%s13 + $0x24] sm:$0xf]
        %v1775 = vld [vmem:[%s13 + $0x28] sm:$0xf]
        %v1776 = vld [vmem:[%s13 + $0x2c] sm:$0xf]
        %v1777 = vld [vmem:[%s13 + $0x30] sm:$0xf]
        %v1778 = vld [vmem:[%s13 + $0x34] sm:$0xf]
        %v1779 = vld [vmem:[%s13 + $0x38] sm:$0xf]
        %v1780 = vld [vmem:[%s13 + $0x3c] sm:$0xf]
        %v1781 = vld [vmem:[%s13 + $0x40] sm:$0xf]
        %v1782 = vld [vmem:[%s13 + $0x44] sm:$0xf]
        %v1783 = vld [vmem:[%s13 + $0x48] sm:$0xf]
        %v1784 = vld [vmem:[%s13 + $0x4c] sm:$0xf]
        %v1785 = vld [vmem:[%s13 + $0x50] sm:$0xf]
        %v1786 = vld [vmem:[%s13 + $0x54] sm:$0xf]
        %v1787 = vld [vmem:[%s13 + $0x58] sm:$0xf]
        %v1788 = vld [vmem:[%s13 + $0x5c] sm:$0xf]
        %v1789 = vld [vmem:[%s13 + $0x60] sm:$0xf]
        %v1790 = vld [vmem:[%s13 + $0x64] sm:$0xf]
        %v1791 = vld [vmem:[%s13 + $0x68] sm:$0xf]
        %v1792 = vld [vmem:[%s13 + $0x6c] sm:$0xf]
        %v1793 = vld [vmem:[%s13 + $0x70] sm:$0xf]
        %v1794 = vld [vmem:[%s13 + $0x74] sm:$0xf]
        %v1795 = vld [vmem:[%s13 + $0x78] sm:$0xf]
        %v1796 = vld [vmem:[%s13 + $0x7c] sm:$0xf]
        %v1797 = vld [vmem:[#allocation5] sm:$0x1]
        %v1830 = vunpack.c.l.b16 %v1765
        %v1831 = vunpack.c.l.b16 %v1766
        %v1832 = vunpack.c.l.b16 %v1767
        %v1833 = vunpack.c.l.b16 %v1768
        %v1834 = vunpack.c.l.b16 %v1769
        %v1835 = vunpack.c.l.b16 %v1770
        %v1836 = vunpack.c.l.b16 %v1771
        %v1837 = vunpack.c.l.b16 %v1772
        %v1838 = vunpack.c.l.b16 %v1773
        %v1839 = vunpack.c.l.b16 %v1774
        %v1840 = vunpack.c.l.b16 %v1775
        %v1841 = vunpack.c.l.b16 %v1776
        %v1842 = vunpack.c.l.b16 %v1777
        %v1843 = vunpack.c.l.b16 %v1778
        %v1844 = vunpack.c.l.b16 %v1779
        %v1845 = vunpack.c.l.b16 %v1780
        %v1846 = vunpack.c.l.b16 %v1781
        %v1847 = vunpack.c.l.b16 %v1782
        %v1848 = vunpack.c.l.b16 %v1783
        %v1849 = vunpack.c.l.b16 %v1784
        %v1850 = vunpack.c.l.b16 %v1785
        %v1851 = vunpack.c.l.b16 %v1786
        %v1852 = vunpack.c.l.b16 %v1787
        %v1853 = vunpack.c.l.b16 %v1788
        %v1854 = vunpack.c.l.b16 %v1789
        %v1855 = vunpack.c.l.b16 %v1790
        %v1856 = vunpack.c.l.b16 %v1791
        %v1857 = vunpack.c.l.b16 %v1792
        %v1858 = vunpack.c.l.b16 %v1793
        %v1859 = vunpack.c.l.b16 %v1794
        %v1860 = vunpack.c.l.b16 %v1795
        %v1861 = vunpack.c.l.b16 %v1796
        %v1862 = vpack.c.b16 %v1831, %v1830
        %v1863 = vpack.c.b16 %v1833, %v1832
        %v1864 = vpack.c.b16 %v1835, %v1834
        %v1865 = vpack.c.b16 %v1837, %v1836
        %v1866 = vpack.c.b16 %v1839, %v1838
        %v1867 = vpack.c.b16 %v1841, %v1840
        %v1868 = vpack.c.b16 %v1843, %v1842
        %v1869 = vpack.c.b16 %v1845, %v1844
        %v1870 = vpack.c.b16 %v1847, %v1846
        %v1871 = vpack.c.b16 %v1849, %v1848
        %v1872 = vpack.c.b16 %v1851, %v1850
        %v1873 = vpack.c.b16 %v1853, %v1852
        %v1874 = vpack.c.b16 %v1855, %v1854
        %v1875 = vpack.c.b16 %v1857, %v1856
        %v1876 = vpack.c.b16 %v1859, %v1858
        %v1877 = vpack.c.b16 %v1861, %v1860
        %1894 = vmatprep.subr.bf16.mxu0 0
        %1895 = vmatpush1.bf16.msra.mxu0 %v1862
        %1896 = vmatprep.subr.bf16.mxu0 0
        %1897 = vmatpush1.bf16.msra.mxu0 %v1863
        %1898 = vmatprep.subr.bf16.mxu0 0
        %1899 = vmatpush1.bf16.msra.mxu0 %v1864
        %1900 = vmatprep.subr.bf16.mxu0 0
        %1901 = vmatpush1.bf16.msra.mxu0 %v1865
        %1902 = vmatprep.subr.bf16.mxu0 0
        %1903 = vmatpush1.bf16.msra.mxu0 %v1866
        %1904 = vmatprep.subr.bf16.mxu0 0
        %1905 = vmatpush1.bf16.msra.mxu0 %v1867
        %1906 = vmatprep.subr.bf16.mxu0 0
        %1907 = vmatpush1.bf16.msra.mxu0 %v1868
        %1908 = vmatprep.subr.bf16.mxu0 0
        %1909 = vmatpush1.bf16.msra.mxu0 %v1869
        %1910 = vmatprep.subr.bf16.mxu0 0
        %1911 = vmatpush1.bf16.msra.mxu0 %v1870
        %1912 = vmatprep.subr.bf16.mxu0 0
        %1913 = vmatpush1.bf16.msra.mxu0 %v1871
        %1914 = vmatprep.subr.bf16.mxu0 0
        %1915 = vmatpush1.bf16.msra.mxu0 %v1872
        %1916 = vmatprep.subr.bf16.mxu0 0
        %1917 = vmatpush1.bf16.msra.mxu0 %v1873
        %1918 = vmatprep.subr.bf16.mxu0 0
        %1919 = vmatpush1.bf16.msra.mxu0 %v1874
        %1920 = vmatprep.subr.bf16.mxu0 0
        %1921 = vmatpush1.bf16.msra.mxu0 %v1875
        %1922 = vmatprep.subr.bf16.mxu0 0
        %1923 = vmatpush1.bf16.msra.mxu0 %v1876
        %1924 = vmatprep.subr.bf16.mxu0 0
        %1925 = vmatpush1.bf16.msra.mxu0 %v1877
        %1926 = vmatprep.mubr.bf16.mxu0 %v1764
        %1927 = vmatmul.mubr.bf16.gmra.mrb[0].mxu0 %v1763
        %v1928 = vpop.f32.mrb[0].mxu0
        %v1929 = vadd.f32 %v1797, %v1928
        %v1930 = vpop.f32.mrb[0].mxu0
        %v1931 = vpop.f32.mrb[0].mxu0
        %v1932 = vpop.f32.mrb[0].mxu0
        %1933 = vdwg.mxu0
        %vm1934 = vcmask 0
        %1935 = vst.msk [vmem:[%s535] sm:$0x1] %vm1934, %v1929
        %p1936 = scmp.lt.s32.totalorder %s31, 1
        %s1937 = scalar_select %p1936, %s31, 1
        %s1938 = scalar_lea.vmem %s16, %s1937
        // Predicated region
        $region89: #{tpu_custom_call.1} parent=83 // pred_check
          %p1939 = pneg %p390
        $region90: #{tpu_custom_call.1} parent=83 // pred_check_branch
          %1941 = sbr.rel (%p1939) target = $region92
        $region91: #{tpu_custom_call.1} parent=83 // pred_region
          _
        $region92: #{tpu_custom_call.1} parent=83 // pred_fallthru
          _
      $region84: #{tpu_custom_call.1} parent=5 // pred_fallthru
        _
      %p1942 = scmp.le.s32.totalorder 2, %s26
      // Predicated region
      $region93: #{tpu_custom_call.1} parent=5 // pred_check
        %p1943 = pneg %p1942
      $region94: #{tpu_custom_call.1} parent=5 // pred_check_branch
        %1945 = sbr.rel (%p1943) target = $region96
      $region95: #{tpu_custom_call.1} parent=5 // pred_region
        %s1946 = ssub.s32 %s26, 2
        // Predicated region
        $region97: #{tpu_custom_call.1} parent=95 // pred_check
          %p1947 = pneg %p396
        $region98: #{tpu_custom_call.1} parent=95 // pred_check_branch
          %1949 = sbr.rel (%p1947) target = $region100
        $region99: #{tpu_custom_call.1} parent=95 // pred_region
          %p1950 = scmp.lt.s32.totalorder %s32, 1
          %s1951 = scalar_select %p1950, %s32, 1
          %s1952 = scalar_lea.vmem %s16, %s1951
        $region100: #{tpu_custom_call.1} parent=95 // pred_fallthru
          _
      $region96: #{tpu_custom_call.1} parent=5 // pred_fallthru
        _
    $region6: #{tpu_custom_call.1} parent=1 // loop_footer
      %s30 = sadd.s32 1, %s26
    $region7: #{tpu_custom_call.1} parent=1 // loop_footer_branch
      %25 = sbr.rel target = $region3
    $region8: #{tpu_custom_call.1} parent=1 // loop_exit
      _
    %1953 = vsyncpa [#allocation8], 1
    %s1954 = scalar_lea.sflag [#allocation8], 1
    %1955 = vsyncpa %s1954, 1

</llo_original>
